<compile_context>
chip_gen: v7x
topology: tpu7x:2x2x1
jax: 0.10.0
libtpu: 0.0.40
codegen_flags: <defaults>
</compile_context>

<pallas_src>
import functools
from types import SimpleNamespace

import numpy as np
import jax
import jax.numpy as jnp
from jax import lax
from jax.experimental import pallas as pl
from jax.experimental.pallas import tpu as pltpu


# ----------------------------- Pallas kernel -----------------------------

def _lm_bilstm_kernel(emb_ref, wih_f_ref, whh_f_ref, b_f_ref,
                      wih_b_ref, whh_b_ref, b_b_ref,
                      wout_ref, bout_ref,
                      fouts_ref, bouts_ref,
                      hsf_ref, hsb_ref, *, L, H):
    """Fused bi-LSTM + deferred out_proj.

    emb_ref    : (L, B, E)  bf16   time-major embedded tokens
    wih_*      : (E, 4H)    bf16   packed input->gates weights (i,f,g,o)
    whh_*      : (H, 4H)    bf16   packed hidden->gates weights
    b_*        : (1, 4H)    f32    packed gate bias (b_ih + b_hh)
    wout       : (H, Vp)    bf16   vocab projection, V padded to Vp (multiple of 128)
    bout       : (1, Vp)    f32
    fouts/bouts: (L, B, Vp) f32    per-timestep logits (bulk lane-dense stores)
    hsf/hsb    : (L, B, H)  f32    VMEM scratch for per-step hidden states
    """
    B = emb_ref.shape[1]
    cdt = wih_f_ref.dtype  # bf16 MXU operand dtype

    # ---- Precompute input-side gate projections for all timesteps (bias folded in) ----
    xs = emb_ref[...].reshape(L * B, emb_ref.shape[2])                  # (L*B, E) bf16
    pre_f = (jnp.dot(xs, wih_f_ref[...], preferred_element_type=jnp.float32)
             + b_f_ref[...]).reshape(L, B, 4 * H)                       # (L, B, 4H) f32
    pre_b = (jnp.dot(xs, wih_b_ref[...], preferred_element_type=jnp.float32)
             + b_b_ref[...]).reshape(L, B, 4 * H)

    whh_f = whh_f_ref[...]
    whh_b = whh_b_ref[...]

    def cell(pre_t, h, c, whh):
        # Single recurrent matmul per step; input projection + bias already folded in.
        gates = pre_t + jnp.dot(h.astype(cdt), whh,
                                preferred_element_type=jnp.float32)     # (B, 4H) f32
        sig = jax.nn.sigmoid(gates)     # one EUP pass covers i, f, o
        tnh = jnp.tanh(gates)           # one EUP pass covers g
        i = sig[:, 0 * H:1 * H]
        f = sig[:, 1 * H:2 * H]
        g = tnh[:, 2 * H:3 * H]
        o = sig[:, 3 * H:4 * H]
        c_new = f * c + i * g
        h_new = o * jnp.tanh(c_new)
        return h_new, c_new

    h_f = jnp.zeros((B, H), jnp.float32)
    c_f = jnp.zeros((B, H), jnp.float32)
    h_b = jnp.zeros((B, H), jnp.float32)
    c_b = jnp.zeros((B, H), jnp.float32)

    # Interleave the two independent direction chains (full unroll: L is small & static).
    for t in range(L):
        tb = L - 1 - t
        h_f, c_f = cell(pre_f[t], h_f, c_f, whh_f)
        h_b, c_b = cell(pre_b[tb], h_b, c_b, whh_b)
        hsf_ref[t] = h_f
        hsb_ref[tb] = h_b

    # ---- Deferred shared out_proj on all 2*L*B hidden states in one matmul ----
    h_all = jnp.concatenate([hsf_ref[...].reshape(L * B, H),
                             hsb_ref[...].reshape(L * B, H)], axis=0)   # (2*L*B, H)
    logits = (jnp.dot(h_all.astype(cdt), wout_ref[...],
                      preferred_element_type=jnp.float32) + bout_ref[...])
    Vp = wout_ref.shape[1]
    fouts_ref[...] = logits[:L * B].reshape(L, B, Vp)
    bouts_ref[...] = logits[L * B:].reshape(L, B, Vp)


# ----------------------------- param prep (one-time, outside per-call path) -----------------------------

def prepare_kernel_params(params):
    """Cast / pack / pad weights into the kernel's layouts once."""
    cdt = jnp.bfloat16
    V = params['w_out'].shape[1]
    Vp = ((V + 127) // 128) * 128          # lane-dense vocab padding (50 -> 128)
    return dict(
        word_embed=params['word_embed'],
        wih_f=params['wih_f'].astype(cdt), whh_f=params['whh_f'].astype(cdt),
        b_f=params['b_f'].astype(jnp.float32),
        wih_b=params['wih_b'].astype(cdt), whh_b=params['whh_b'].astype(cdt),
        b_b=params['b_b'].astype(jnp.float32),
        w_out=jnp.pad(params['w_out'], ((0, 0), (0, Vp - V))).astype(cdt),
        b_out=jnp.pad(params['b_out'], (0, Vp - V)).reshape(1, Vp).astype(jnp.float32),
    )


# ----------------------------- wrapper -----------------------------

def lm_forward(kparams, inps, *, vocab_size):
    """fouts, bouts = LM(inps) with all recurrent compute in one Pallas kernel."""
    B, L = inps.shape
    H = kparams['whh_f'].shape[0]
    Vp = kparams['w_out'].shape[1]

    # TODO(synk): data-dependent embedding row gather stays in plain JAX.
    emb = kparams['word_embed'][inps]                                  # (B, L, E) f32
    emb_t = jnp.transpose(emb, (1, 0, 2)).astype(jnp.bfloat16)         # (L, B, E) bf16

    kernel = functools.partial(_lm_bilstm_kernel, L=L, H=H)
    fouts_p, bouts_p = pl.pallas_call(
        kernel,
        out_shape=[jax.ShapeDtypeStruct((L, B, Vp), jnp.float32),
                   jax.ShapeDtypeStruct((L, B, Vp), jnp.float32)],
        in_specs=[pl.BlockSpec(memory_space=pltpu.MemorySpace.VMEM)] * 9,
        out_specs=[pl.BlockSpec(memory_space=pltpu.MemorySpace.VMEM)] * 2,
        scratch_shapes=[pltpu.VMEM((L, B, H), jnp.float32),
                        pltpu.VMEM((L, B, H), jnp.float32)],
    )(emb_t, kparams['wih_f'], kparams['whh_f'], kparams['b_f'],
      kparams['wih_b'], kparams['whh_b'], kparams['b_b'],
      kparams['w_out'], kparams['b_out'])

    fouts = jnp.transpose(fouts_p, (1, 0, 2))[:, :, :vocab_size]       # (B, L, V)
    bouts = jnp.transpose(bouts_p, (1, 0, 2))[:, :, :vocab_size]
    return fouts, bouts


# ----------------------------- pure-JAX reference (f32) -----------------------------

def lm_forward_ref(params, inps):
    emb = params['word_embed'][inps]                                   # (B, L, E)
    B, L, _ = emb.shape
    H = params['whh_f'].shape[0]

    def run_dir(wih, whh, b, reverse):
        def step(carry, x_t):
            h, c = carry
            gates = x_t @ wih + h @ whh + b
            i = jax.nn.sigmoid(gates[:, 0 * H:1 * H])
            f = jax.nn.sigmoid(gates[:, 1 * H:2 * H])
            g = jnp.tanh(gates[:, 2 * H:3 * H])
            o = jax.nn.sigmoid(gates[:, 3 * H:4 * H])
            c = f * c + i * g
            h = o * jnp.tanh(c)
            return (h, c), h

        xs = jnp.transpose(emb, (1, 0, 2))
        if reverse:
            xs = xs[::-1]
        carry0 = (jnp.zeros((B, H), jnp.float32), jnp.zeros((B, H), jnp.float32))
        _, hs = lax.scan(step, carry0, xs)
        if reverse:
            hs = hs[::-1]
        return jnp.transpose(hs, (1, 0, 2))                            # (B, L, H)

    hf = run_dir(params['wih_f'], params['whh_f'], params['b_f'], False)
    hb = run_dir(params['wih_b'], params['whh_b'], params['b_b'], True)
    fouts = hf @ params['w_out'] + params['b_out']
    bouts = hb @ params['w_out'] + params['b_out']
    return fouts, bouts


# ----------------------------- params -----------------------------

def init_params(hps, key):
    E, H, V = hps.emb_size, hps.hidden_size, hps.vocab_size
    ks = jax.random.split(key, 8)

    def nrm(k, shape, scale=0.1):
        return (scale * jax.random.normal(k, shape)).astype(jnp.float32)

    emb = nrm(ks[0], (V, E))
    emb = emb.at[hps.pad_idx].set(0.0)          # padding_idx row is zero

    return dict(
        word_embed=emb,
        # packed gate weights: columns ordered [i | f | g | o] (PyTorch LSTM order)
        wih_f=nrm(ks[1], (E, 4 * H)), whh_f=nrm(ks[2], (H, 4 * H)),
        b_f=jnp.zeros((1, 4 * H), jnp.float32),
        wih_b=nrm(ks[3], (E, 4 * H)), whh_b=nrm(ks[4], (H, 4 * H)),
        b_b=jnp.zeros((1, 4 * H), jnp.float32),
        w_out=nrm(ks[5], (H, V)), b_out=nrm(ks[6], (V,), 0.01),
    )


# ----------------------------- main -----------------------------

if __name__ == "__main__":
    hps = SimpleNamespace(emb_size=16, hidden_size=32, vocab_size=50,
                          pad_idx=0, drop_ratio=0.1)
    B, L = 2, 8

    key = jax.random.PRNGKey(0)
    k_param, k_tok = jax.random.split(key)
    params = init_params(hps, k_param)
    kparams = prepare_kernel_params(params)     # one-time weight prep (not in per-call path)

    inps = jax.random.randint(k_tok, (B, L), 1, hps.vocab_size, dtype=jnp.int32)
    inps = inps.at[:, -1].set(hps.pad_idx)      # last position padded

    fwd = jax.jit(functools.partial(lm_forward, vocab_size=hps.vocab_size))
    fouts, bouts = jax.block_until_ready(fwd(kparams, inps))

    # shape + numerics sanity vs pure-JAX f32 reference (kernel uses bf16 MXU operands)
    assert fouts.shape == (B, L, hps.vocab_size)
    assert bouts.shape == (B, L, hps.vocab_size)
    f_ref, b_ref = lm_forward_ref(params, inps)
    np.testing.assert_allclose(np.asarray(fouts), np.asarray(f_ref), atol=5e-3, rtol=1e-2)
    np.testing.assert_allclose(np.asarray(bouts), np.asarray(b_ref), atol=5e-3, rtol=1e-2)

    print("KERNEL_OK")
</pallas_src>

<mosaic_0001>
module attributes {stable_mosaic.version = 11 : i64} {
  func.func @_lm_bilstm_kernel(%arg0: memref<8x2x16xbf16, #tpu.memory_space<vmem>>, %arg1: memref<16x128xbf16, #tpu.memory_space<vmem>>, %arg2: memref<32x128xbf16, #tpu.memory_space<vmem>>, %arg3: memref<1x128xf32, #tpu.memory_space<vmem>>, %arg4: memref<16x128xbf16, #tpu.memory_space<vmem>>, %arg5: memref<32x128xbf16, #tpu.memory_space<vmem>>, %arg6: memref<1x128xf32, #tpu.memory_space<vmem>>, %arg7: memref<32x128xbf16, #tpu.memory_space<vmem>>, %arg8: memref<1x128xf32, #tpu.memory_space<vmem>>, %arg9: memref<8x2x128xf32, #tpu.memory_space<vmem>>, %arg10: memref<8x2x128xf32, #tpu.memory_space<vmem>>, %arg11: memref<8x2x32xf32, #tpu.memory_space<vmem>>, %arg12: memref<8x2x32xf32, #tpu.memory_space<vmem>>) attributes {dimension_semantics = [], scalar_prefetch = 0 : i64, scratch_operands = 2 : i64, tpu.core_type = #tpu.core_type<tc>} {
    %c0 = arith.constant 0 : index
    %c0_0 = arith.constant 0 : index
    %c0_1 = arith.constant 0 : index
    %0 = vector.load %arg0[%c0, %c0_0, %c0_1] : memref<8x2x16xbf16, #tpu.memory_space<vmem>>, vector<8x2x16xbf16>
    %1 = vector.shape_cast %0 : vector<8x2x16xbf16> to vector<16x16xbf16>
    %c0_2 = arith.constant 0 : index
    %c0_3 = arith.constant 0 : index
    %2 = vector.load %arg1[%c0_2, %c0_3] : memref<16x128xbf16, #tpu.memory_space<vmem>>, vector<16x128xbf16>
    %cst = arith.constant dense<0.000000e+00> : vector<16x128xf32>
    %3 = tpu.matmul %1, %2, %cst {dimension_numbers = #tpu.dot_dimension_numbers<[1], [0], [0], [1], [0, 0, 1, 1], [], []>} : vector<16x16xbf16>, vector<16x128xbf16>, vector<16x128xf32> -> vector<16x128xf32>
    %c0_4 = arith.constant 0 : index
    %c0_5 = arith.constant 0 : index
    %4 = vector.load %arg3[%c0_4, %c0_5] : memref<1x128xf32, #tpu.memory_space<vmem>>, vector<1x128xf32>
    %5 = vector.broadcast %4 : vector<1x128xf32> to vector<16x128xf32>
    %6 = arith.addf %3, %5 : vector<16x128xf32>
    %7 = vector.shape_cast %6 : vector<16x128xf32> to vector<8x2x128xf32>
    %c0_6 = arith.constant 0 : index
    %c0_7 = arith.constant 0 : index
    %8 = vector.load %arg4[%c0_6, %c0_7] : memref<16x128xbf16, #tpu.memory_space<vmem>>, vector<16x128xbf16>
    %cst_8 = arith.constant dense<0.000000e+00> : vector<16x128xf32>
    %9 = tpu.matmul %1, %8, %cst_8 {dimension_numbers = #tpu.dot_dimension_numbers<[1], [0], [0], [1], [0, 0, 1, 1], [], []>} : vector<16x16xbf16>, vector<16x128xbf16>, vector<16x128xf32> -> vector<16x128xf32>
    %c0_9 = arith.constant 0 : index
    %c0_10 = arith.constant 0 : index
    %10 = vector.load %arg6[%c0_9, %c0_10] : memref<1x128xf32, #tpu.memory_space<vmem>>, vector<1x128xf32>
    %11 = vector.broadcast %10 : vector<1x128xf32> to vector<16x128xf32>
    %12 = arith.addf %9, %11 : vector<16x128xf32>
    %13 = vector.shape_cast %12 : vector<16x128xf32> to vector<8x2x128xf32>
    %c0_11 = arith.constant 0 : index
    %c0_12 = arith.constant 0 : index
    %14 = vector.load %arg2[%c0_11, %c0_12] : memref<32x128xbf16, #tpu.memory_space<vmem>>, vector<32x128xbf16>
    %c0_13 = arith.constant 0 : index
    %c0_14 = arith.constant 0 : index
    %15 = vector.load %arg5[%c0_13, %c0_14] : memref<32x128xbf16, #tpu.memory_space<vmem>>, vector<32x128xbf16>
    %cst_15 = arith.constant 0.000000e+00 : f32
    %16 = vector.broadcast %cst_15 : f32 to vector<2x32xf32>
    %cst_16 = arith.constant 0.000000e+00 : f32
    %17 = vector.broadcast %cst_16 : f32 to vector<2x32xf32>
    %cst_17 = arith.constant 0.000000e+00 : f32
    %18 = vector.broadcast %cst_17 : f32 to vector<2x32xf32>
    %cst_18 = arith.constant 0.000000e+00 : f32
    %19 = vector.broadcast %cst_18 : f32 to vector<2x32xf32>
    %20 = vector.extract_strided_slice %7 {offsets = [0, 0, 0], sizes = [1, 2, 128], strides = [1, 1, 1]} : vector<8x2x128xf32> to vector<1x2x128xf32>
    %21 = vector.shape_cast %20 : vector<1x2x128xf32> to vector<2x128xf32>
    %22 = arith.truncf %16 : vector<2x32xf32> to vector<2x32xbf16>
    %cst_19 = arith.constant dense<0.000000e+00> : vector<2x128xf32>
    %23 = tpu.matmul %22, %14, %cst_19 {dimension_numbers = #tpu.dot_dimension_numbers<[1], [0], [0], [1], [0, 0, 1, 1], [], []>} : vector<2x32xbf16>, vector<32x128xbf16>, vector<2x128xf32> -> vector<2x128xf32>
    %24 = arith.addf %21, %23 : vector<2x128xf32>
    %25 = arith.negf %24 : vector<2x128xf32>
    %26 = math.exp %25 : vector<2x128xf32>
    %cst_20 = arith.constant 1.000000e+00 : f32
    %27 = vector.broadcast %cst_20 : f32 to vector<2x128xf32>
    %28 = arith.addf %27, %26 : vector<2x128xf32>
    %29 = arith.divf %27, %28 : vector<2x128xf32>
    %30 = math.tanh %24 : vector<2x128xf32>
    %31 = vector.extract_strided_slice %29 {offsets = [0, 0], sizes = [2, 32], strides = [1, 1]} : vector<2x128xf32> to vector<2x32xf32>
    %32 = vector.extract_strided_slice %29 {offsets = [0, 32], sizes = [2, 32], strides = [1, 1]} : vector<2x128xf32> to vector<2x32xf32>
    %33 = vector.extract_strided_slice %30 {offsets = [0, 64], sizes = [2, 32], strides = [1, 1]} : vector<2x128xf32> to vector<2x32xf32>
    %34 = vector.extract_strided_slice %29 {offsets = [0, 96], sizes = [2, 32], strides = [1, 1]} : vector<2x128xf32> to vector<2x32xf32>
    %35 = arith.mulf %32, %17 : vector<2x32xf32>
    %36 = arith.mulf %31, %33 : vector<2x32xf32>
    %37 = arith.addf %35, %36 : vector<2x32xf32>
    %38 = math.tanh %37 : vector<2x32xf32>
    %39 = arith.mulf %34, %38 : vector<2x32xf32>
    %40 = vector.extract_strided_slice %13 {offsets = [7, 0, 0], sizes = [1, 2, 128], strides = [1, 1, 1]} : vector<8x2x128xf32> to vector<1x2x128xf32>
    %41 = vector.shape_cast %40 : vector<1x2x128xf32> to vector<2x128xf32>
    %42 = arith.truncf %18 : vector<2x32xf32> to vector<2x32xbf16>
    %cst_21 = arith.constant dense<0.000000e+00> : vector<2x128xf32>
    %43 = tpu.matmul %42, %15, %cst_21 {dimension_numbers = #tpu.dot_dimension_numbers<[1], [0], [0], [1], [0, 0, 1, 1], [], []>} : vector<2x32xbf16>, vector<32x128xbf16>, vector<2x128xf32> -> vector<2x128xf32>
    %44 = arith.addf %41, %43 : vector<2x128xf32>
    %45 = arith.negf %44 : vector<2x128xf32>
    %46 = math.exp %45 : vector<2x128xf32>
    %cst_22 = arith.constant 1.000000e+00 : f32
    %47 = vector.broadcast %cst_22 : f32 to vector<2x128xf32>
    %48 = arith.addf %47, %46 : vector<2x128xf32>
    %49 = arith.divf %47, %48 : vector<2x128xf32>
    %50 = math.tanh %44 : vector<2x128xf32>
    %51 = vector.extract_strided_slice %49 {offsets = [0, 0], sizes = [2, 32], strides = [1, 1]} : vector<2x128xf32> to vector<2x32xf32>
    %52 = vector.extract_strided_slice %49 {offsets = [0, 32], sizes = [2, 32], strides = [1, 1]} : vector<2x128xf32> to vector<2x32xf32>
    %53 = vector.extract_strided_slice %50 {offsets = [0, 64], sizes = [2, 32], strides = [1, 1]} : vector<2x128xf32> to vector<2x32xf32>
    %54 = vector.extract_strided_slice %49 {offsets = [0, 96], sizes = [2, 32], strides = [1, 1]} : vector<2x128xf32> to vector<2x32xf32>
    %55 = arith.mulf %52, %19 : vector<2x32xf32>
    %56 = arith.mulf %51, %53 : vector<2x32xf32>
    %57 = arith.addf %55, %56 : vector<2x32xf32>
    %58 = math.tanh %57 : vector<2x32xf32>
    %59 = arith.mulf %54, %58 : vector<2x32xf32>
    %c0_23 = arith.constant 0 : index
    %c0_24 = arith.constant 0 : index
    %c0_25 = arith.constant 0 : index
    %60 = vector.load %arg11[%c0_23, %c0_24, %c0_25] : memref<8x2x32xf32, #tpu.memory_space<vmem>>, vector<1x2x32xf32>
    %61 = vector.shape_cast %60 : vector<1x2x32xf32> to vector<2x32xf32>
    %62 = vector.shape_cast %39 : vector<2x32xf32> to vector<1x2x32xf32>
    tpu.vector_store %arg11[%c0_23, %c0_24, %c0_25], %62 {strides = array<i32>} : memref<8x2x32xf32, #tpu.memory_space<vmem>>, vector<1x2x32xf32>,
    %c7 = arith.constant 7 : index
    %c0_26 = arith.constant 0 : index
    %c0_27 = arith.constant 0 : index
    %63 = vector.load %arg12[%c7, %c0_26, %c0_27] : memref<8x2x32xf32, #tpu.memory_space<vmem>>, vector<1x2x32xf32>
    %64 = vector.shape_cast %63 : vector<1x2x32xf32> to vector<2x32xf32>
    %65 = vector.shape_cast %59 : vector<2x32xf32> to vector<1x2x32xf32>
    tpu.vector_store %arg12[%c7, %c0_26, %c0_27], %65 {strides = array<i32>} : memref<8x2x32xf32, #tpu.memory_space<vmem>>, vector<1x2x32xf32>,
    %66 = vector.extract_strided_slice %7 {offsets = [1, 0, 0], sizes = [1, 2, 128], strides = [1, 1, 1]} : vector<8x2x128xf32> to vector<1x2x128xf32>
    %67 = vector.shape_cast %66 : vector<1x2x128xf32> to vector<2x128xf32>
    %68 = arith.truncf %39 : vector<2x32xf32> to vector<2x32xbf16>
    %cst_28 = arith.constant dense<0.000000e+00> : vector<2x128xf32>
    %69 = tpu.matmul %68, %14, %cst_28 {dimension_numbers = #tpu.dot_dimension_numbers<[1], [0], [0], [1], [0, 0, 1, 1], [], []>} : vector<2x32xbf16>, vector<32x128xbf16>, vector<2x128xf32> -> vector<2x128xf32>
    %70 = arith.addf %67, %69 : vector<2x128xf32>
    %71 = arith.negf %70 : vector<2x128xf32>
    %72 = math.exp %71 : vector<2x128xf32>
    %cst_29 = arith.constant 1.000000e+00 : f32
    %73 = vector.broadcast %cst_29 : f32 to vector<2x128xf32>
    %74 = arith.addf %73, %72 : vector<2x128xf32>
    %75 = arith.divf %73, %74 : vector<2x128xf32>
    %76 = math.tanh %70 : vector<2x128xf32>
    %77 = vector.extract_strided_slice %75 {offsets = [0, 0], sizes = [2, 32], strides = [1, 1]} : vector<2x128xf32> to vector<2x32xf32>
    %78 = vector.extract_strided_slice %75 {offsets = [0, 32], sizes = [2, 32], strides = [1, 1]} : vector<2x128xf32> to vector<2x32xf32>
    %79 = vector.extract_strided_slice %76 {offsets = [0, 64], sizes = [2, 32], strides = [1, 1]} : vector<2x128xf32> to vector<2x32xf32>
    %80 = vector.extract_strided_slice %75 {offsets = [0, 96], sizes = [2, 32], strides = [1, 1]} : vector<2x128xf32> to vector<2x32xf32>
    %81 = arith.mulf %78, %37 : vector<2x32xf32>
    %82 = arith.mulf %77, %79 : vector<2x32xf32>
    %83 = arith.addf %81, %82 : vector<2x32xf32>
    %84 = math.tanh %83 : vector<2x32xf32>
    %85 = arith.mulf %80, %84 : vector<2x32xf32>
    %86 = vector.extract_strided_slice %13 {offsets = [6, 0, 0], sizes = [1, 2, 128], strides = [1, 1, 1]} : vector<8x2x128xf32> to vector<1x2x128xf32>
    %87 = vector.shape_cast %86 : vector<1x2x128xf32> to vector<2x128xf32>
    %88 = arith.truncf %59 : vector<2x32xf32> to vector<2x32xbf16>
    %cst_30 = arith.constant dense<0.000000e+00> : vector<2x128xf32>
    %89 = tpu.matmul %88, %15, %cst_30 {dimension_numbers = #tpu.dot_dimension_numbers<[1], [0], [0], [1], [0, 0, 1, 1], [], []>} : vector<2x32xbf16>, vector<32x128xbf16>, vector<2x128xf32> -> vector<2x128xf32>
    %90 = arith.addf %87, %89 : vector<2x128xf32>
    %91 = arith.negf %90 : vector<2x128xf32>
    %92 = math.exp %91 : vector<2x128xf32>
    %cst_31 = arith.constant 1.000000e+00 : f32
    %93 = vector.broadcast %cst_31 : f32 to vector<2x128xf32>
    %94 = arith.addf %93, %92 : vector<2x128xf32>
    %95 = arith.divf %93, %94 : vector<2x128xf32>
    %96 = math.tanh %90 : vector<2x128xf32>
    %97 = vector.extract_strided_slice %95 {offsets = [0, 0], sizes = [2, 32], strides = [1, 1]} : vector<2x128xf32> to vector<2x32xf32>
    %98 = vector.extract_strided_slice %95 {offsets = [0, 32], sizes = [2, 32], strides = [1, 1]} : vector<2x128xf32> to vector<2x32xf32>
    %99 = vector.extract_strided_slice %96 {offsets = [0, 64], sizes = [2, 32], strides = [1, 1]} : vector<2x128xf32> to vector<2x32xf32>
    %100 = vector.extract_strided_slice %95 {offsets = [0, 96], sizes = [2, 32], strides = [1, 1]} : vector<2x128xf32> to vector<2x32xf32>
    %101 = arith.mulf %98, %57 : vector<2x32xf32>
    %102 = arith.mulf %97, %99 : vector<2x32xf32>
    %103 = arith.addf %101, %102 : vector<2x32xf32>
    %104 = math.tanh %103 : vector<2x32xf32>
    %105 = arith.mulf %100, %104 : vector<2x32xf32>
    %c1 = arith.constant 1 : index
    %c0_32 = arith.constant 0 : index
    %c0_33 = arith.constant 0 : index
    %106 = vector.load %arg11[%c1, %c0_32, %c0_33] : memref<8x2x32xf32, #tpu.memory_space<vmem>>, vector<1x2x32xf32>
    %107 = vector.shape_cast %106 : vector<1x2x32xf32> to vector<2x32xf32>
    %108 = vector.shape_cast %85 : vector<2x32xf32> to vector<1x2x32xf32>
    tpu.vector_store %arg11[%c1, %c0_32, %c0_33], %108 {strides = array<i32>} : memref<8x2x32xf32, #tpu.memory_space<vmem>>, vector<1x2x32xf32>,
    %c6 = arith.constant 6 : index
    %c0_34 = arith.constant 0 : index
    %c0_35 = arith.constant 0 : index
    %109 = vector.load %arg12[%c6, %c0_34, %c0_35] : memref<8x2x32xf32, #tpu.memory_space<vmem>>, vector<1x2x32xf32>
    %110 = vector.shape_cast %109 : vector<1x2x32xf32> to vector<2x32xf32>
    %111 = vector.shape_cast %105 : vector<2x32xf32> to vector<1x2x32xf32>
    tpu.vector_store %arg12[%c6, %c0_34, %c0_35], %111 {strides = array<i32>} : memref<8x2x32xf32, #tpu.memory_space<vmem>>, vector<1x2x32xf32>,
    %112 = vector.extract_strided_slice %7 {offsets = [2, 0, 0], sizes = [1, 2, 128], strides = [1, 1, 1]} : vector<8x2x128xf32> to vector<1x2x128xf32>
    %113 = vector.shape_cast %112 : vector<1x2x128xf32> to vector<2x128xf32>
    %114 = arith.truncf %85 : vector<2x32xf32> to vector<2x32xbf16>
    %cst_36 = arith.constant dense<0.000000e+00> : vector<2x128xf32>
    %115 = tpu.matmul %114, %14, %cst_36 {dimension_numbers = #tpu.dot_dimension_numbers<[1], [0], [0], [1], [0, 0, 1, 1], [], []>} : vector<2x32xbf16>, vector<32x128xbf16>, vector<2x128xf32> -> vector<2x128xf32>
    %116 = arith.addf %113, %115 : vector<2x128xf32>
    %117 = arith.negf %116 : vector<2x128xf32>
    %118 = math.exp %117 : vector<2x128xf32>
    %cst_37 = arith.constant 1.000000e+00 : f32
    %119 = vector.broadcast %cst_37 : f32 to vector<2x128xf32>
    %120 = arith.addf %119, %118 : vector<2x128xf32>
    %121 = arith.divf %119, %120 : vector<2x128xf32>
    %122 = math.tanh %116 : vector<2x128xf32>
    %123 = vector.extract_strided_slice %121 {offsets = [0, 0], sizes = [2, 32], strides = [1, 1]} : vector<2x128xf32> to vector<2x32xf32>
    %124 = vector.extract_strided_slice %121 {offsets = [0, 32], sizes = [2, 32], strides = [1, 1]} : vector<2x128xf32> to vector<2x32xf32>
    %125 = vector.extract_strided_slice %122 {offsets = [0, 64], sizes = [2, 32], strides = [1, 1]} : vector<2x128xf32> to vector<2x32xf32>
    %126 = vector.extract_strided_slice %121 {offsets = [0, 96], sizes = [2, 32], strides = [1, 1]} : vector<2x128xf32> to vector<2x32xf32>
    %127 = arith.mulf %124, %83 : vector<2x32xf32>
    %128 = arith.mulf %123, %125 : vector<2x32xf32>
    %129 = arith.addf %127, %128 : vector<2x32xf32>
    %130 = math.tanh %129 : vector<2x32xf32>
    %131 = arith.mulf %126, %130 : vector<2x32xf32>
    %132 = vector.extract_strided_slice %13 {offsets = [5, 0, 0], sizes = [1, 2, 128], strides = [1, 1, 1]} : vector<8x2x128xf32> to vector<1x2x128xf32>
    %133 = vector.shape_cast %132 : vector<1x2x128xf32> to vector<2x128xf32>
    %134 = arith.truncf %105 : vector<2x32xf32> to vector<2x32xbf16>
    %cst_38 = arith.constant dense<0.000000e+00> : vector<2x128xf32>
    %135 = tpu.matmul %134, %15, %cst_38 {dimension_numbers = #tpu.dot_dimension_numbers<[1], [0], [0], [1], [0, 0, 1, 1], [], []>} : vector<2x32xbf16>, vector<32x128xbf16>, vector<2x128xf32> -> vector<2x128xf32>
    %136 = arith.addf %133, %135 : vector<2x128xf32>
    %137 = arith.negf %136 : vector<2x128xf32>
    %138 = math.exp %137 : vector<2x128xf32>
    %cst_39 = arith.constant 1.000000e+00 : f32
    %139 = vector.broadcast %cst_39 : f32 to vector<2x128xf32>
    %140 = arith.addf %139, %138 : vector<2x128xf32>
    %141 = arith.divf %139, %140 : vector<2x128xf32>
    %142 = math.tanh %136 : vector<2x128xf32>
    %143 = vector.extract_strided_slice %141 {offsets = [0, 0], sizes = [2, 32], strides = [1, 1]} : vector<2x128xf32> to vector<2x32xf32>
    %144 = vector.extract_strided_slice %141 {offsets = [0, 32], sizes = [2, 32], strides = [1, 1]} : vector<2x128xf32> to vector<2x32xf32>
    %145 = vector.extract_strided_slice %142 {offsets = [0, 64], sizes = [2, 32], strides = [1, 1]} : vector<2x128xf32> to vector<2x32xf32>
    %146 = vector.extract_strided_slice %141 {offsets = [0, 96], sizes = [2, 32], strides = [1, 1]} : vector<2x128xf32> to vector<2x32xf32>
    %147 = arith.mulf %144, %103 : vector<2x32xf32>
    %148 = arith.mulf %143, %145 : vector<2x32xf32>
    %149 = arith.addf %147, %148 : vector<2x32xf32>
    %150 = math.tanh %149 : vector<2x32xf32>
    %151 = arith.mulf %146, %150 : vector<2x32xf32>
    %c2 = arith.constant 2 : index
    %c0_40 = arith.constant 0 : index
    %c0_41 = arith.constant 0 : index
    %152 = vector.load %arg11[%c2, %c0_40, %c0_41] : memref<8x2x32xf32, #tpu.memory_space<vmem>>, vector<1x2x32xf32>
    %153 = vector.shape_cast %152 : vector<1x2x32xf32> to vector<2x32xf32>
    %154 = vector.shape_cast %131 : vector<2x32xf32> to vector<1x2x32xf32>
    tpu.vector_store %arg11[%c2, %c0_40, %c0_41], %154 {strides = array<i32>} : memref<8x2x32xf32, #tpu.memory_space<vmem>>, vector<1x2x32xf32>,
    %c5 = arith.constant 5 : index
    %c0_42 = arith.constant 0 : index
    %c0_43 = arith.constant 0 : index
    %155 = vector.load %arg12[%c5, %c0_42, %c0_43] : memref<8x2x32xf32, #tpu.memory_space<vmem>>, vector<1x2x32xf32>
    %156 = vector.shape_cast %155 : vector<1x2x32xf32> to vector<2x32xf32>
    %157 = vector.shape_cast %151 : vector<2x32xf32> to vector<1x2x32xf32>
    tpu.vector_store %arg12[%c5, %c0_42, %c0_43], %157 {strides = array<i32>} : memref<8x2x32xf32, #tpu.memory_space<vmem>>, vector<1x2x32xf32>,
    %158 = vector.extract_strided_slice %7 {offsets = [3, 0, 0], sizes = [1, 2, 128], strides = [1, 1, 1]} : vector<8x2x128xf32> to vector<1x2x128xf32>
    %159 = vector.shape_cast %158 : vector<1x2x128xf32> to vector<2x128xf32>
    %160 = arith.truncf %131 : vector<2x32xf32> to vector<2x32xbf16>
    %cst_44 = arith.constant dense<0.000000e+00> : vector<2x128xf32>
    %161 = tpu.matmul %160, %14, %cst_44 {dimension_numbers = #tpu.dot_dimension_numbers<[1], [0], [0], [1], [0, 0, 1, 1], [], []>} : vector<2x32xbf16>, vector<32x128xbf16>, vector<2x128xf32> -> vector<2x128xf32>
    %162 = arith.addf %159, %161 : vector<2x128xf32>
    %163 = arith.negf %162 : vector<2x128xf32>
    %164 = math.exp %163 : vector<2x128xf32>
    %cst_45 = arith.constant 1.000000e+00 : f32
    %165 = vector.broadcast %cst_45 : f32 to vector<2x128xf32>
    %166 = arith.addf %165, %164 : vector<2x128xf32>
    %167 = arith.divf %165, %166 : vector<2x128xf32>
    %168 = math.tanh %162 : vector<2x128xf32>
    %169 = vector.extract_strided_slice %167 {offsets = [0, 0], sizes = [2, 32], strides = [1, 1]} : vector<2x128xf32> to vector<2x32xf32>
    %170 = vector.extract_strided_slice %167 {offsets = [0, 32], sizes = [2, 32], strides = [1, 1]} : vector<2x128xf32> to vector<2x32xf32>
    %171 = vector.extract_strided_slice %168 {offsets = [0, 64], sizes = [2, 32], strides = [1, 1]} : vector<2x128xf32> to vector<2x32xf32>
    %172 = vector.extract_strided_slice %167 {offsets = [0, 96], sizes = [2, 32], strides = [1, 1]} : vector<2x128xf32> to vector<2x32xf32>
    %173 = arith.mulf %170, %129 : vector<2x32xf32>
    %174 = arith.mulf %169, %171 : vector<2x32xf32>
    %175 = arith.addf %173, %174 : vector<2x32xf32>
    %176 = math.tanh %175 : vector<2x32xf32>
    %177 = arith.mulf %172, %176 : vector<2x32xf32>
    %178 = vector.extract_strided_slice %13 {offsets = [4, 0, 0], sizes = [1, 2, 128], strides = [1, 1, 1]} : vector<8x2x128xf32> to vector<1x2x128xf32>
    %179 = vector.shape_cast %178 : vector<1x2x128xf32> to vector<2x128xf32>
    %180 = arith.truncf %151 : vector<2x32xf32> to vector<2x32xbf16>
    %cst_46 = arith.constant dense<0.000000e+00> : vector<2x128xf32>
    %181 = tpu.matmul %180, %15, %cst_46 {dimension_numbers = #tpu.dot_dimension_numbers<[1], [0], [0], [1], [0, 0, 1, 1], [], []>} : vector<2x32xbf16>, vector<32x128xbf16>, vector<2x128xf32> -> vector<2x128xf32>
    %182 = arith.addf %179, %181 : vector<2x128xf32>
    %183 = arith.negf %182 : vector<2x128xf32>
    %184 = math.exp %183 : vector<2x128xf32>
    %cst_47 = arith.constant 1.000000e+00 : f32
    %185 = vector.broadcast %cst_47 : f32 to vector<2x128xf32>
    %186 = arith.addf %185, %184 : vector<2x128xf32>
    %187 = arith.divf %185, %186 : vector<2x128xf32>
    %188 = math.tanh %182 : vector<2x128xf32>
    %189 = vector.extract_strided_slice %187 {offsets = [0, 0], sizes = [2, 32], strides = [1, 1]} : vector<2x128xf32> to vector<2x32xf32>
    %190 = vector.extract_strided_slice %187 {offsets = [0, 32], sizes = [2, 32], strides = [1, 1]} : vector<2x128xf32> to vector<2x32xf32>
    %191 = vector.extract_strided_slice %188 {offsets = [0, 64], sizes = [2, 32], strides = [1, 1]} : vector<2x128xf32> to vector<2x32xf32>
    %192 = vector.extract_strided_slice %187 {offsets = [0, 96], sizes = [2, 32], strides = [1, 1]} : vector<2x128xf32> to vector<2x32xf32>
    %193 = arith.mulf %190, %149 : vector<2x32xf32>
    %194 = arith.mulf %189, %191 : vector<2x32xf32>
    %195 = arith.addf %193, %194 : vector<2x32xf32>
    %196 = math.tanh %195 : vector<2x32xf32>
    %197 = arith.mulf %192, %196 : vector<2x32xf32>
    %c3 = arith.constant 3 : index
    %c0_48 = arith.constant 0 : index
    %c0_49 = arith.constant 0 : index
    %198 = vector.load %arg11[%c3, %c0_48, %c0_49] : memref<8x2x32xf32, #tpu.memory_space<vmem>>, vector<1x2x32xf32>
    %199 = vector.shape_cast %198 : vector<1x2x32xf32> to vector<2x32xf32>
    %200 = vector.shape_cast %177 : vector<2x32xf32> to vector<1x2x32xf32>
    tpu.vector_store %arg11[%c3, %c0_48, %c0_49], %200 {strides = array<i32>} : memref<8x2x32xf32, #tpu.memory_space<vmem>>, vector<1x2x32xf32>,
    %c4 = arith.constant 4 : index
    %c0_50 = arith.constant 0 : index
    %c0_51 = arith.constant 0 : index
    %201 = vector.load %arg12[%c4, %c0_50, %c0_51] : memref<8x2x32xf32, #tpu.memory_space<vmem>>, vector<1x2x32xf32>
    %202 = vector.shape_cast %201 : vector<1x2x32xf32> to vector<2x32xf32>
    %203 = vector.shape_cast %197 : vector<2x32xf32> to vector<1x2x32xf32>
    tpu.vector_store %arg12[%c4, %c0_50, %c0_51], %203 {strides = array<i32>} : memref<8x2x32xf32, #tpu.memory_space<vmem>>, vector<1x2x32xf32>,
    %204 = vector.extract_strided_slice %7 {offsets = [4, 0, 0], sizes = [1, 2, 128], strides = [1, 1, 1]} : vector<8x2x128xf32> to vector<1x2x128xf32>
    %205 = vector.shape_cast %204 : vector<1x2x128xf32> to vector<2x128xf32>
    %206 = arith.truncf %177 : vector<2x32xf32> to vector<2x32xbf16>
    %cst_52 = arith.constant dense<0.000000e+00> : vector<2x128xf32>
    %207 = tpu.matmul %206, %14, %cst_52 {dimension_numbers = #tpu.dot_dimension_numbers<[1], [0], [0], [1], [0, 0, 1, 1], [], []>} : vector<2x32xbf16>, vector<32x128xbf16>, vector<2x128xf32> -> vector<2x128xf32>
    %208 = arith.addf %205, %207 : vector<2x128xf32>
    %209 = arith.negf %208 : vector<2x128xf32>
    %210 = math.exp %209 : vector<2x128xf32>
    %cst_53 = arith.constant 1.000000e+00 : f32
    %211 = vector.broadcast %cst_53 : f32 to vector<2x128xf32>
    %212 = arith.addf %211, %210 : vector<2x128xf32>
    %213 = arith.divf %211, %212 : vector<2x128xf32>
    %214 = math.tanh %208 : vector<2x128xf32>
    %215 = vector.extract_strided_slice %213 {offsets = [0, 0], sizes = [2, 32], strides = [1, 1]} : vector<2x128xf32> to vector<2x32xf32>
    %216 = vector.extract_strided_slice %213 {offsets = [0, 32], sizes = [2, 32], strides = [1, 1]} : vector<2x128xf32> to vector<2x32xf32>
    %217 = vector.extract_strided_slice %214 {offsets = [0, 64], sizes = [2, 32], strides = [1, 1]} : vector<2x128xf32> to vector<2x32xf32>
    %218 = vector.extract_strided_slice %213 {offsets = [0, 96], sizes = [2, 32], strides = [1, 1]} : vector<2x128xf32> to vector<2x32xf32>
    %219 = arith.mulf %216, %175 : vector<2x32xf32>
    %220 = arith.mulf %215, %217 : vector<2x32xf32>
    %221 = arith.addf %219, %220 : vector<2x32xf32>
    %222 = math.tanh %221 : vector<2x32xf32>
    %223 = arith.mulf %218, %222 : vector<2x32xf32>
    %224 = vector.extract_strided_slice %13 {offsets = [3, 0, 0], sizes = [1, 2, 128], strides = [1, 1, 1]} : vector<8x2x128xf32> to vector<1x2x128xf32>
    %225 = vector.shape_cast %224 : vector<1x2x128xf32> to vector<2x128xf32>
    %226 = arith.truncf %197 : vector<2x32xf32> to vector<2x32xbf16>
    %cst_54 = arith.constant dense<0.000000e+00> : vector<2x128xf32>
    %227 = tpu.matmul %226, %15, %cst_54 {dimension_numbers = #tpu.dot_dimension_numbers<[1], [0], [0], [1], [0, 0, 1, 1], [], []>} : vector<2x32xbf16>, vector<32x128xbf16>, vector<2x128xf32> -> vector<2x128xf32>
    %228 = arith.addf %225, %227 : vector<2x128xf32>
    %229 = arith.negf %228 : vector<2x128xf32>
    %230 = math.exp %229 : vector<2x128xf32>
    %cst_55 = arith.constant 1.000000e+00 : f32
    %231 = vector.broadcast %cst_55 : f32 to vector<2x128xf32>
    %232 = arith.addf %231, %230 : vector<2x128xf32>
    %233 = arith.divf %231, %232 : vector<2x128xf32>
    %234 = math.tanh %228 : vector<2x128xf32>
    %235 = vector.extract_strided_slice %233 {offsets = [0, 0], sizes = [2, 32], strides = [1, 1]} : vector<2x128xf32> to vector<2x32xf32>
    %236 = vector.extract_strided_slice %233 {offsets = [0, 32], sizes = [2, 32], strides = [1, 1]} : vector<2x128xf32> to vector<2x32xf32>
    %237 = vector.extract_strided_slice %234 {offsets = [0, 64], sizes = [2, 32], strides = [1, 1]} : vector<2x128xf32> to vector<2x32xf32>
    %238 = vector.extract_strided_slice %233 {offsets = [0, 96], sizes = [2, 32], strides = [1, 1]} : vector<2x128xf32> to vector<2x32xf32>
    %239 = arith.mulf %236, %195 : vector<2x32xf32>
    %240 = arith.mulf %235, %237 : vector<2x32xf32>
    %241 = arith.addf %239, %240 : vector<2x32xf32>
    %242 = math.tanh %241 : vector<2x32xf32>
    %243 = arith.mulf %238, %242 : vector<2x32xf32>
    %c4_56 = arith.constant 4 : index
    %c0_57 = arith.constant 0 : index
    %c0_58 = arith.constant 0 : index
    %244 = vector.load %arg11[%c4_56, %c0_57, %c0_58] : memref<8x2x32xf32, #tpu.memory_space<vmem>>, vector<1x2x32xf32>
    %245 = vector.shape_cast %244 : vector<1x2x32xf32> to vector<2x32xf32>
    %246 = vector.shape_cast %223 : vector<2x32xf32> to vector<1x2x32xf32>
    tpu.vector_store %arg11[%c4_56, %c0_57, %c0_58], %246 {strides = array<i32>} : memref<8x2x32xf32, #tpu.memory_space<vmem>>, vector<1x2x32xf32>,
    %c3_59 = arith.constant 3 : index
    %c0_60 = arith.constant 0 : index
    %c0_61 = arith.constant 0 : index
    %247 = vector.load %arg12[%c3_59, %c0_60, %c0_61] : memref<8x2x32xf32, #tpu.memory_space<vmem>>, vector<1x2x32xf32>
    %248 = vector.shape_cast %247 : vector<1x2x32xf32> to vector<2x32xf32>
    %249 = vector.shape_cast %243 : vector<2x32xf32> to vector<1x2x32xf32>
    tpu.vector_store %arg12[%c3_59, %c0_60, %c0_61], %249 {strides = array<i32>} : memref<8x2x32xf32, #tpu.memory_space<vmem>>, vector<1x2x32xf32>,
    %250 = vector.extract_strided_slice %7 {offsets = [5, 0, 0], sizes = [1, 2, 128], strides = [1, 1, 1]} : vector<8x2x128xf32> to vector<1x2x128xf32>
    %251 = vector.shape_cast %250 : vector<1x2x128xf32> to vector<2x128xf32>
    %252 = arith.truncf %223 : vector<2x32xf32> to vector<2x32xbf16>
    %cst_62 = arith.constant dense<0.000000e+00> : vector<2x128xf32>
    %253 = tpu.matmul %252, %14, %cst_62 {dimension_numbers = #tpu.dot_dimension_numbers<[1], [0], [0], [1], [0, 0, 1, 1], [], []>} : vector<2x32xbf16>, vector<32x128xbf16>, vector<2x128xf32> -> vector<2x128xf32>
    %254 = arith.addf %251, %253 : vector<2x128xf32>
    %255 = arith.negf %254 : vector<2x128xf32>
    %256 = math.exp %255 : vector<2x128xf32>
    %cst_63 = arith.constant 1.000000e+00 : f32
    %257 = vector.broadcast %cst_63 : f32 to vector<2x128xf32>
    %258 = arith.addf %257, %256 : vector<2x128xf32>
    %259 = arith.divf %257, %258 : vector<2x128xf32>
    %260 = math.tanh %254 : vector<2x128xf32>
    %261 = vector.extract_strided_slice %259 {offsets = [0, 0], sizes = [2, 32], strides = [1, 1]} : vector<2x128xf32> to vector<2x32xf32>
    %262 = vector.extract_strided_slice %259 {offsets = [0, 32], sizes = [2, 32], strides = [1, 1]} : vector<2x128xf32> to vector<2x32xf32>
    %263 = vector.extract_strided_slice %260 {offsets = [0, 64], sizes = [2, 32], strides = [1, 1]} : vector<2x128xf32> to vector<2x32xf32>
    %264 = vector.extract_strided_slice %259 {offsets = [0, 96], sizes = [2, 32], strides = [1, 1]} : vector<2x128xf32> to vector<2x32xf32>
    %265 = arith.mulf %262, %221 : vector<2x32xf32>
    %266 = arith.mulf %261, %263 : vector<2x32xf32>
    %267 = arith.addf %265, %266 : vector<2x32xf32>
    %268 = math.tanh %267 : vector<2x32xf32>
    %269 = arith.mulf %264, %268 : vector<2x32xf32>
    %270 = vector.extract_strided_slice %13 {offsets = [2, 0, 0], sizes = [1, 2, 128], strides = [1, 1, 1]} : vector<8x2x128xf32> to vector<1x2x128xf32>
    %271 = vector.shape_cast %270 : vector<1x2x128xf32> to vector<2x128xf32>
    %272 = arith.truncf %243 : vector<2x32xf32> to vector<2x32xbf16>
    %cst_64 = arith.constant dense<0.000000e+00> : vector<2x128xf32>
    %273 = tpu.matmul %272, %15, %cst_64 {dimension_numbers = #tpu.dot_dimension_numbers<[1], [0], [0], [1], [0, 0, 1, 1], [], []>} : vector<2x32xbf16>, vector<32x128xbf16>, vector<2x128xf32> -> vector<2x128xf32>
    %274 = arith.addf %271, %273 : vector<2x128xf32>
    %275 = arith.negf %274 : vector<2x128xf32>
    %276 = math.exp %275 : vector<2x128xf32>
    %cst_65 = arith.constant 1.000000e+00 : f32
    %277 = vector.broadcast %cst_65 : f32 to vector<2x128xf32>
    %278 = arith.addf %277, %276 : vector<2x128xf32>
    %279 = arith.divf %277, %278 : vector<2x128xf32>
    %280 = math.tanh %274 : vector<2x128xf32>
    %281 = vector.extract_strided_slice %279 {offsets = [0, 0], sizes = [2, 32], strides = [1, 1]} : vector<2x128xf32> to vector<2x32xf32>
    %282 = vector.extract_strided_slice %279 {offsets = [0, 32], sizes = [2, 32], strides = [1, 1]} : vector<2x128xf32> to vector<2x32xf32>
    %283 = vector.extract_strided_slice %280 {offsets = [0, 64], sizes = [2, 32], strides = [1, 1]} : vector<2x128xf32> to vector<2x32xf32>
    %284 = vector.extract_strided_slice %279 {offsets = [0, 96], sizes = [2, 32], strides = [1, 1]} : vector<2x128xf32> to vector<2x32xf32>
    %285 = arith.mulf %282, %241 : vector<2x32xf32>
    %286 = arith.mulf %281, %283 : vector<2x32xf32>
    %287 = arith.addf %285, %286 : vector<2x32xf32>
    %288 = math.tanh %287 : vector<2x32xf32>
    %289 = arith.mulf %284, %288 : vector<2x32xf32>
    %c5_66 = arith.constant 5 : index
    %c0_67 = arith.constant 0 : index
    %c0_68 = arith.constant 0 : index
    %290 = vector.load %arg11[%c5_66, %c0_67, %c0_68] : memref<8x2x32xf32, #tpu.memory_space<vmem>>, vector<1x2x32xf32>
    %291 = vector.shape_cast %290 : vector<1x2x32xf32> to vector<2x32xf32>
    %292 = vector.shape_cast %269 : vector<2x32xf32> to vector<1x2x32xf32>
    tpu.vector_store %arg11[%c5_66, %c0_67, %c0_68], %292 {strides = array<i32>} : memref<8x2x32xf32, #tpu.memory_space<vmem>>, vector<1x2x32xf32>,
    %c2_69 = arith.constant 2 : index
    %c0_70 = arith.constant 0 : index
    %c0_71 = arith.constant 0 : index
    %293 = vector.load %arg12[%c2_69, %c0_70, %c0_71] : memref<8x2x32xf32, #tpu.memory_space<vmem>>, vector<1x2x32xf32>
    %294 = vector.shape_cast %293 : vector<1x2x32xf32> to vector<2x32xf32>
    %295 = vector.shape_cast %289 : vector<2x32xf32> to vector<1x2x32xf32>
    tpu.vector_store %arg12[%c2_69, %c0_70, %c0_71], %295 {strides = array<i32>} : memref<8x2x32xf32, #tpu.memory_space<vmem>>, vector<1x2x32xf32>,
    %296 = vector.extract_strided_slice %7 {offsets = [6, 0, 0], sizes = [1, 2, 128], strides = [1, 1, 1]} : vector<8x2x128xf32> to vector<1x2x128xf32>
    %297 = vector.shape_cast %296 : vector<1x2x128xf32> to vector<2x128xf32>
    %298 = arith.truncf %269 : vector<2x32xf32> to vector<2x32xbf16>
    %cst_72 = arith.constant dense<0.000000e+00> : vector<2x128xf32>
    %299 = tpu.matmul %298, %14, %cst_72 {dimension_numbers = #tpu.dot_dimension_numbers<[1], [0], [0], [1], [0, 0, 1, 1], [], []>} : vector<2x32xbf16>, vector<32x128xbf16>, vector<2x128xf32> -> vector<2x128xf32>
    %300 = arith.addf %297, %299 : vector<2x128xf32>
    %301 = arith.negf %300 : vector<2x128xf32>
    %302 = math.exp %301 : vector<2x128xf32>
    %cst_73 = arith.constant 1.000000e+00 : f32
    %303 = vector.broadcast %cst_73 : f32 to vector<2x128xf32>
    %304 = arith.addf %303, %302 : vector<2x128xf32>
    %305 = arith.divf %303, %304 : vector<2x128xf32>
    %306 = math.tanh %300 : vector<2x128xf32>
    %307 = vector.extract_strided_slice %305 {offsets = [0, 0], sizes = [2, 32], strides = [1, 1]} : vector<2x128xf32> to vector<2x32xf32>
    %308 = vector.extract_strided_slice %305 {offsets = [0, 32], sizes = [2, 32], strides = [1, 1]} : vector<2x128xf32> to vector<2x32xf32>
    %309 = vector.extract_strided_slice %306 {offsets = [0, 64], sizes = [2, 32], strides = [1, 1]} : vector<2x128xf32> to vector<2x32xf32>
    %310 = vector.extract_strided_slice %305 {offsets = [0, 96], sizes = [2, 32], strides = [1, 1]} : vector<2x128xf32> to vector<2x32xf32>
    %311 = arith.mulf %308, %267 : vector<2x32xf32>
    %312 = arith.mulf %307, %309 : vector<2x32xf32>
    %313 = arith.addf %311, %312 : vector<2x32xf32>
    %314 = math.tanh %313 : vector<2x32xf32>
    %315 = arith.mulf %310, %314 : vector<2x32xf32>
    %316 = vector.extract_strided_slice %13 {offsets = [1, 0, 0], sizes = [1, 2, 128], strides = [1, 1, 1]} : vector<8x2x128xf32> to vector<1x2x128xf32>
    %317 = vector.shape_cast %316 : vector<1x2x128xf32> to vector<2x128xf32>
    %318 = arith.truncf %289 : vector<2x32xf32> to vector<2x32xbf16>
    %cst_74 = arith.constant dense<0.000000e+00> : vector<2x128xf32>
    %319 = tpu.matmul %318, %15, %cst_74 {dimension_numbers = #tpu.dot_dimension_numbers<[1], [0], [0], [1], [0, 0, 1, 1], [], []>} : vector<2x32xbf16>, vector<32x128xbf16>, vector<2x128xf32> -> vector<2x128xf32>
    %320 = arith.addf %317, %319 : vector<2x128xf32>
    %321 = arith.negf %320 : vector<2x128xf32>
    %322 = math.exp %321 : vector<2x128xf32>
    %cst_75 = arith.constant 1.000000e+00 : f32
    %323 = vector.broadcast %cst_75 : f32 to vector<2x128xf32>
    %324 = arith.addf %323, %322 : vector<2x128xf32>
    %325 = arith.divf %323, %324 : vector<2x128xf32>
    %326 = math.tanh %320 : vector<2x128xf32>
    %327 = vector.extract_strided_slice %325 {offsets = [0, 0], sizes = [2, 32], strides = [1, 1]} : vector<2x128xf32> to vector<2x32xf32>
    %328 = vector.extract_strided_slice %325 {offsets = [0, 32], sizes = [2, 32], strides = [1, 1]} : vector<2x128xf32> to vector<2x32xf32>
    %329 = vector.extract_strided_slice %326 {offsets = [0, 64], sizes = [2, 32], strides = [1, 1]} : vector<2x128xf32> to vector<2x32xf32>
    %330 = vector.extract_strided_slice %325 {offsets = [0, 96], sizes = [2, 32], strides = [1, 1]} : vector<2x128xf32> to vector<2x32xf32>
    %331 = arith.mulf %328, %287 : vector<2x32xf32>
    %332 = arith.mulf %327, %329 : vector<2x32xf32>
    %333 = arith.addf %331, %332 : vector<2x32xf32>
    %334 = math.tanh %333 : vector<2x32xf32>
    %335 = arith.mulf %330, %334 : vector<2x32xf32>
    %c6_76 = arith.constant 6 : index
    %c0_77 = arith.constant 0 : index
    %c0_78 = arith.constant 0 : index
    %336 = vector.load %arg11[%c6_76, %c0_77, %c0_78] : memref<8x2x32xf32, #tpu.memory_space<vmem>>, vector<1x2x32xf32>
    %337 = vector.shape_cast %336 : vector<1x2x32xf32> to vector<2x32xf32>
    %338 = vector.shape_cast %315 : vector<2x32xf32> to vector<1x2x32xf32>
    tpu.vector_store %arg11[%c6_76, %c0_77, %c0_78], %338 {strides = array<i32>} : memref<8x2x32xf32, #tpu.memory_space<vmem>>, vector<1x2x32xf32>,
    %c1_79 = arith.constant 1 : index
    %c0_80 = arith.constant 0 : index
    %c0_81 = arith.constant 0 : index
    %339 = vector.load %arg12[%c1_79, %c0_80, %c0_81] : memref<8x2x32xf32, #tpu.memory_space<vmem>>, vector<1x2x32xf32>
    %340 = vector.shape_cast %339 : vector<1x2x32xf32> to vector<2x32xf32>
    %341 = vector.shape_cast %335 : vector<2x32xf32> to vector<1x2x32xf32>
    tpu.vector_store %arg12[%c1_79, %c0_80, %c0_81], %341 {strides = array<i32>} : memref<8x2x32xf32, #tpu.memory_space<vmem>>, vector<1x2x32xf32>,
    %342 = vector.extract_strided_slice %7 {offsets = [7, 0, 0], sizes = [1, 2, 128], strides = [1, 1, 1]} : vector<8x2x128xf32> to vector<1x2x128xf32>
    %343 = vector.shape_cast %342 : vector<1x2x128xf32> to vector<2x128xf32>
    %344 = arith.truncf %315 : vector<2x32xf32> to vector<2x32xbf16>
    %cst_82 = arith.constant dense<0.000000e+00> : vector<2x128xf32>
    %345 = tpu.matmul %344, %14, %cst_82 {dimension_numbers = #tpu.dot_dimension_numbers<[1], [0], [0], [1], [0, 0, 1, 1], [], []>} : vector<2x32xbf16>, vector<32x128xbf16>, vector<2x128xf32> -> vector<2x128xf32>
    %346 = arith.addf %343, %345 : vector<2x128xf32>
    %347 = arith.negf %346 : vector<2x128xf32>
    %348 = math.exp %347 : vector<2x128xf32>
    %cst_83 = arith.constant 1.000000e+00 : f32
    %349 = vector.broadcast %cst_83 : f32 to vector<2x128xf32>
    %350 = arith.addf %349, %348 : vector<2x128xf32>
    %351 = arith.divf %349, %350 : vector<2x128xf32>
    %352 = math.tanh %346 : vector<2x128xf32>
    %353 = vector.extract_strided_slice %351 {offsets = [0, 0], sizes = [2, 32], strides = [1, 1]} : vector<2x128xf32> to vector<2x32xf32>
    %354 = vector.extract_strided_slice %351 {offsets = [0, 32], sizes = [2, 32], strides = [1, 1]} : vector<2x128xf32> to vector<2x32xf32>
    %355 = vector.extract_strided_slice %352 {offsets = [0, 64], sizes = [2, 32], strides = [1, 1]} : vector<2x128xf32> to vector<2x32xf32>
    %356 = vector.extract_strided_slice %351 {offsets = [0, 96], sizes = [2, 32], strides = [1, 1]} : vector<2x128xf32> to vector<2x32xf32>
    %357 = arith.mulf %354, %313 : vector<2x32xf32>
    %358 = arith.mulf %353, %355 : vector<2x32xf32>
    %359 = arith.addf %357, %358 : vector<2x32xf32>
    %360 = math.tanh %359 : vector<2x32xf32>
    %361 = arith.mulf %356, %360 : vector<2x32xf32>
    %362 = vector.extract_strided_slice %13 {offsets = [0, 0, 0], sizes = [1, 2, 128], strides = [1, 1, 1]} : vector<8x2x128xf32> to vector<1x2x128xf32>
    %363 = vector.shape_cast %362 : vector<1x2x128xf32> to vector<2x128xf32>
    %364 = arith.truncf %335 : vector<2x32xf32> to vector<2x32xbf16>
    %cst_84 = arith.constant dense<0.000000e+00> : vector<2x128xf32>
    %365 = tpu.matmul %364, %15, %cst_84 {dimension_numbers = #tpu.dot_dimension_numbers<[1], [0], [0], [1], [0, 0, 1, 1], [], []>} : vector<2x32xbf16>, vector<32x128xbf16>, vector<2x128xf32> -> vector<2x128xf32>
    %366 = arith.addf %363, %365 : vector<2x128xf32>
    %367 = arith.negf %366 : vector<2x128xf32>
    %368 = math.exp %367 : vector<2x128xf32>
    %cst_85 = arith.constant 1.000000e+00 : f32
    %369 = vector.broadcast %cst_85 : f32 to vector<2x128xf32>
    %370 = arith.addf %369, %368 : vector<2x128xf32>
    %371 = arith.divf %369, %370 : vector<2x128xf32>
    %372 = math.tanh %366 : vector<2x128xf32>
    %373 = vector.extract_strided_slice %371 {offsets = [0, 0], sizes = [2, 32], strides = [1, 1]} : vector<2x128xf32> to vector<2x32xf32>
    %374 = vector.extract_strided_slice %371 {offsets = [0, 32], sizes = [2, 32], strides = [1, 1]} : vector<2x128xf32> to vector<2x32xf32>
    %375 = vector.extract_strided_slice %372 {offsets = [0, 64], sizes = [2, 32], strides = [1, 1]} : vector<2x128xf32> to vector<2x32xf32>
    %376 = vector.extract_strided_slice %371 {offsets = [0, 96], sizes = [2, 32], strides = [1, 1]} : vector<2x128xf32> to vector<2x32xf32>
    %377 = arith.mulf %374, %333 : vector<2x32xf32>
    %378 = arith.mulf %373, %375 : vector<2x32xf32>
    %379 = arith.addf %377, %378 : vector<2x32xf32>
    %380 = math.tanh %379 : vector<2x32xf32>
    %381 = arith.mulf %376, %380 : vector<2x32xf32>
    %c7_86 = arith.constant 7 : index
    %c0_87 = arith.constant 0 : index
    %c0_88 = arith.constant 0 : index
    %382 = vector.load %arg11[%c7_86, %c0_87, %c0_88] : memref<8x2x32xf32, #tpu.memory_space<vmem>>, vector<1x2x32xf32>
    %383 = vector.shape_cast %382 : vector<1x2x32xf32> to vector<2x32xf32>
    %384 = vector.shape_cast %361 : vector<2x32xf32> to vector<1x2x32xf32>
    tpu.vector_store %arg11[%c7_86, %c0_87, %c0_88], %384 {strides = array<i32>} : memref<8x2x32xf32, #tpu.memory_space<vmem>>, vector<1x2x32xf32>,
    %c0_89 = arith.constant 0 : index
    %c0_90 = arith.constant 0 : index
    %c0_91 = arith.constant 0 : index
    %385 = vector.load %arg12[%c0_89, %c0_90, %c0_91] : memref<8x2x32xf32, #tpu.memory_space<vmem>>, vector<1x2x32xf32>
    %386 = vector.shape_cast %385 : vector<1x2x32xf32> to vector<2x32xf32>
    %387 = vector.shape_cast %381 : vector<2x32xf32> to vector<1x2x32xf32>
    tpu.vector_store %arg12[%c0_89, %c0_90, %c0_91], %387 {strides = array<i32>} : memref<8x2x32xf32, #tpu.memory_space<vmem>>, vector<1x2x32xf32>,
    %c0_92 = arith.constant 0 : index
    %c0_93 = arith.constant 0 : index
    %c0_94 = arith.constant 0 : index
    %388 = vector.load %arg11[%c0_92, %c0_93, %c0_94] : memref<8x2x32xf32, #tpu.memory_space<vmem>>, vector<8x2x32xf32>
    %389 = vector.shape_cast %388 : vector<8x2x32xf32> to vector<16x32xf32>
    %c0_95 = arith.constant 0 : index
    %c0_96 = arith.constant 0 : index
    %c0_97 = arith.constant 0 : index
    %390 = vector.load %arg12[%c0_95, %c0_96, %c0_97] : memref<8x2x32xf32, #tpu.memory_space<vmem>>, vector<8x2x32xf32>
    %391 = vector.shape_cast %390 : vector<8x2x32xf32> to vector<16x32xf32>
    %392 = tpu.concatenate %389, %391 in 0 : vector<16x32xf32>, vector<16x32xf32> -> vector<32x32xf32>
    %393 = arith.truncf %392 : vector<32x32xf32> to vector<32x32xbf16>
    %c0_98 = arith.constant 0 : index
    %c0_99 = arith.constant 0 : index
    %394 = vector.load %arg7[%c0_98, %c0_99] : memref<32x128xbf16, #tpu.memory_space<vmem>>, vector<32x128xbf16>
    %cst_100 = arith.constant dense<0.000000e+00> : vector<32x128xf32>
    %395 = tpu.matmul %393, %394, %cst_100 {dimension_numbers = #tpu.dot_dimension_numbers<[1], [0], [0], [1], [0, 0, 1, 1], [], []>} : vector<32x32xbf16>, vector<32x128xbf16>, vector<32x128xf32> -> vector<32x128xf32>
    %c0_101 = arith.constant 0 : index
    %c0_102 = arith.constant 0 : index
    %396 = vector.load %arg8[%c0_101, %c0_102] : memref<1x128xf32, #tpu.memory_space<vmem>>, vector<1x128xf32>
    %397 = vector.broadcast %396 : vector<1x128xf32> to vector<32x128xf32>
    %398 = arith.addf %395, %397 : vector<32x128xf32>
    %399 = vector.extract_strided_slice %398 {offsets = [0, 0], sizes = [16, 128], strides = [1, 1]} : vector<32x128xf32> to vector<16x128xf32>
    %400 = vector.shape_cast %399 : vector<16x128xf32> to vector<8x2x128xf32>
    %c0_103 = arith.constant 0 : index
    %c0_104 = arith.constant 0 : index
    %c0_105 = arith.constant 0 : index
    %401 = vector.load %arg9[%c0_103, %c0_104, %c0_105] : memref<8x2x128xf32, #tpu.memory_space<vmem>>, vector<8x2x128xf32>
    tpu.vector_store %arg9[%c0_103, %c0_104, %c0_105], %400 {strides = array<i32>} : memref<8x2x128xf32, #tpu.memory_space<vmem>>, vector<8x2x128xf32>,
    %402 = vector.extract_strided_slice %398 {offsets = [16, 0], sizes = [16, 128], strides = [1, 1]} : vector<32x128xf32> to vector<16x128xf32>
    %403 = vector.shape_cast %402 : vector<16x128xf32> to vector<8x2x128xf32>
    %c0_106 = arith.constant 0 : index
    %c0_107 = arith.constant 0 : index
    %c0_108 = arith.constant 0 : index
    %404 = vector.load %arg10[%c0_106, %c0_107, %c0_108] : memref<8x2x128xf32, #tpu.memory_space<vmem>>, vector<8x2x128xf32>
    tpu.vector_store %arg10[%c0_106, %c0_107, %c0_108], %403 {strides = array<i32>} : memref<8x2x128xf32, #tpu.memory_space<vmem>>, vector<8x2x128xf32>,
    return
  }
}

</mosaic_0001>

<llo_original>
// kernel: lm_forward.1
$region0: #{lm_forward.1}
  #allocation0 [shape = 'u32[]', space=smem, size = 0x4, offset = 0x4, fixed_abs, tag = 'smem constant byte address 0x4 - core index']
  #allocation1 [shape = 'u32[144,128]{1,0:T(1,128)}', space=vmem, size = 0x12000, scoped, tag = 'internal scratch']
  #allocation2 [shape = 'f32[8,2,32]{2,1,0:T(2,128)}', space=vmem, size = 0x2000, scoped, tag = 'scratch operand']
  #allocation3 [shape = 'f32[8,2,32]{2,1,0:T(2,128)}', space=vmem, size = 0x2000, scoped, tag = 'scratch operand']
  %s0 = inlined_call_operand.vmem [shape: bf16[8,2,16], index: 0, kind: input, shape index: {}]
  %s1 = inlined_call_operand.vmem [shape: bf16[16,128], index: 1, kind: input, shape index: {}]
  %s2 = inlined_call_operand.vmem [shape: bf16[32,128], index: 2, kind: input, shape index: {}]
  %s3 = inlined_call_operand.vmem [shape: f32[1,128], index: 3, kind: input, shape index: {}]
  %s4 = inlined_call_operand.vmem [shape: bf16[16,128], index: 4, kind: input, shape index: {}]
  %s5 = inlined_call_operand.vmem [shape: bf16[32,128], index: 5, kind: input, shape index: {}]
  %s6 = inlined_call_operand.vmem [shape: f32[1,128], index: 6, kind: input, shape index: {}]
  %s7 = inlined_call_operand.vmem [shape: bf16[32,128], index: 7, kind: input, shape index: {}]
  %s8 = inlined_call_operand.vmem [shape: f32[1,128], index: 8, kind: input, shape index: {}]
  %s9 = inlined_call_operand.vmem [shape: f32[8,2,128], index: 9, kind: output, shape index: {0}]
  %s10 = inlined_call_operand.vmem [shape: f32[8,2,128], index: 10, kind: output, shape index: {1}]
  %11 = xla_tuple %s9, %s10
  %s12 = sld [smem:[#allocation0]]
  $region54: #{lm_forward.1} parent=0
    _
  %s14 = ssub.s32 1, %s12
  %s15 = scalar_select 0, %s14, %s12
  // Predicated region
  $region2: #{lm_forward.1} parent=0 // pred_check
    _
  $region3: #{lm_forward.1} parent=0 // pred_check_branch
    %17 = sbr.rel (0) target = $region5
  $region4: #{lm_forward.1} parent=0 // pred_region
    _
  $region5: #{lm_forward.1} parent=0 // pred_fallthru
    _
  // Predicated region
  $region6: #{lm_forward.1} parent=0 // pred_check
    _
  $region7: #{lm_forward.1} parent=0 // pred_check_branch
    %19 = sbr.rel (0) target = $region9
  $region8: #{lm_forward.1} parent=0 // pred_region
    _
  $region9: #{lm_forward.1} parent=0 // pred_fallthru
    _
  // Predicated region
  $region10: #{lm_forward.1} parent=0 // pred_check
    _
  $region11: #{lm_forward.1} parent=0 // pred_check_branch
    %21 = sbr.rel (0) target = $region13
  $region12: #{lm_forward.1} parent=0 // pred_region
    _
  $region13: #{lm_forward.1} parent=0 // pred_fallthru
    _
  // Predicated region
  $region14: #{lm_forward.1} parent=0 // pred_check
    _
  $region15: #{lm_forward.1} parent=0 // pred_check_branch
    %23 = sbr.rel (0) target = $region17
  $region16: #{lm_forward.1} parent=0 // pred_region
    _
  $region17: #{lm_forward.1} parent=0 // pred_fallthru
    _
  // Predicated region
  $region18: #{lm_forward.1} parent=0 // pred_check
    _
  $region19: #{lm_forward.1} parent=0 // pred_check_branch
    %25 = sbr.rel (0) target = $region21
  $region20: #{lm_forward.1} parent=0 // pred_region
    _
  $region21: #{lm_forward.1} parent=0 // pred_fallthru
    _
  // Predicated region
  $region22: #{lm_forward.1} parent=0 // pred_check
    _
  $region23: #{lm_forward.1} parent=0 // pred_check_branch
    %27 = sbr.rel (0) target = $region25
  $region24: #{lm_forward.1} parent=0 // pred_region
    _
  $region25: #{lm_forward.1} parent=0 // pred_fallthru
    _
  // Predicated region
  $region26: #{lm_forward.1} parent=0 // pred_check
    _
  $region27: #{lm_forward.1} parent=0 // pred_check_branch
    %29 = sbr.rel (0) target = $region29
  $region28: #{lm_forward.1} parent=0 // pred_region
    _
  $region29: #{lm_forward.1} parent=0 // pred_fallthru
    _
  // Predicated region
  $region30: #{lm_forward.1} parent=0 // pred_check
    _
  $region31: #{lm_forward.1} parent=0 // pred_check_branch
    %31 = sbr.rel (0) target = $region33
  $region32: #{lm_forward.1} parent=0 // pred_region
    _
  $region33: #{lm_forward.1} parent=0 // pred_fallthru
    _
  // Predicated region
  $region34: #{lm_forward.1} parent=0 // pred_check
    _
  $region35: #{lm_forward.1} parent=0 // pred_check_branch
    %33 = sbr.rel (0) target = $region37
  $region36: #{lm_forward.1} parent=0 // pred_region
    _
  $region37: #{lm_forward.1} parent=0 // pred_fallthru
    _
  %v35 = vld [vmem:[%s0] sm:$0x1]
  %v36 = vld [vmem:[%s0 + $0x1] sm:$0x1]
  %v37 = vld [vmem:[%s0 + $0x2] sm:$0x1]
  %v38 = vld [vmem:[%s0 + $0x3] sm:$0x1]
  %v39 = vld [vmem:[%s0 + $0x4] sm:$0x1]
  %v40 = vld [vmem:[%s0 + $0x5] sm:$0x1]
  %v41 = vld [vmem:[%s0 + $0x6] sm:$0x1]
  %v42 = vld [vmem:[%s0 + $0x7] sm:$0x1]
  %v43 = vld [vmem:[%s1] sm:$0xf]
  %v44 = vld [vmem:[%s1 + $0x4] sm:$0xf]
  %v45 = vld [vmem:[%s3] sm:$0x1]
  %v47 = vlaneseq
  %v48 = vshrl.u32 %v47, 7
  %v49 = vsub.s32 0, %v48
  %v50 = vrot.slane %v45, %v49
  %v60 = vcombine.low %v35, %v36
  %v61 = vcombine.low %v37, %v38
  %v62 = vcombine.low %v39, %v40
  %v63 = vcombine.low %v41, %v42
  %v65 = vunpack.c.l.s4 1966171168
  %v66 = vunpack.c.0.s8 %v65
  %v67 = vlaneseq
  %v68 = vshrl.u32 %v67, 7
  %v69 = vsub.s32 %v66, %v68
  %v70 = vrot.slane %v60, %v69
  %v72 = vunpack.c.l.s4 1966171168
  %v73 = vunpack.c.0.s8 %v72
  %v74 = vlaneseq
  %v75 = vshrl.u32 %v74, 7
  %v76 = vsub.s32 %v73, %v75
  %v77 = vrot.slane %v61, %v76
  %v79 = vunpack.c.l.s4 1966171168
  %v80 = vunpack.c.0.s8 %v79
  %v81 = vlaneseq
  %v82 = vshrl.u32 %v81, 7
  %v83 = vsub.s32 %v80, %v82
  %v84 = vrot.slane %v62, %v83
  %v86 = vunpack.c.l.s4 1966171168
  %v87 = vunpack.c.0.s8 %v86
  %v88 = vlaneseq
  %v89 = vshrl.u32 %v88, 7
  %v90 = vsub.s32 %v87, %v89
  %v91 = vrot.slane %v63, %v90
  %v92 = vcombine.low %v70, %v77
  %v93 = vcombine.low %v84, %v91
  %v95 = vunpack.c.l.s4 1966171168
  %v96 = vunpack.c.0.s8 %v95
  %v97 = vlaneseq
  %v98 = vshrl.u32 %v97, 7
  %v99 = vsub.s32 %v96, %v98
  %v100 = vrot.slane %v92, %v99
  %v102 = vunpack.c.l.s4 1966171168
  %v103 = vunpack.c.0.s8 %v102
  %v104 = vlaneseq
  %v105 = vshrl.u32 %v104, 7
  %v106 = vsub.s32 %v103, %v105
  %v107 = vrot.slane %v93, %v106
  %v108 = vcombine.low %v100, %v107
  %v111 = vunpack.c.l.b16 %v43
  %v112 = vunpack.c.l.b16 %v44
  %v113 = vpack.c.b16 %v112, %v111
  %vm115 = vcmask 130048
  %v117 = vsel %vm115, %v108, 0
  %119 = vmatprep.subr.bf16.mxu0 0
  %120 = vmatpush1.bf16.msra.mxu0 %v113
  %121 = vmatprep.subr.bf16.mxu0 0
  %122 = vmatpush1.bf16.msra.mxu0 0
  %123 = vmatprep.subr.bf16.mxu0 0
  %124 = vmatpush1.bf16.msra.mxu0 0
  %125 = vmatprep.subr.bf16.mxu0 0
  %126 = vmatpush1.bf16.msra.mxu0 0
  %127 = vmatprep.subr.bf16.mxu0 0
  %128 = vmatpush1.bf16.msra.mxu0 0
  %129 = vmatprep.subr.bf16.mxu0 0
  %130 = vmatpush1.bf16.msra.mxu0 0
  %131 = vmatprep.subr.bf16.mxu0 0
  %132 = vmatpush1.bf16.msra.mxu0 0
  %133 = vmatprep.subr.bf16.mxu0 0
  %134 = vmatpush1.bf16.msra.mxu0 0
  %135 = vmatprep.subr.bf16.mxu0 0
  %136 = vmatpush1.bf16.msra.mxu0 0
  %137 = vmatprep.subr.bf16.mxu0 0
  %138 = vmatpush1.bf16.msra.mxu0 0
  %139 = vmatprep.subr.bf16.mxu0 0
  %140 = vmatpush1.bf16.msra.mxu0 0
  %141 = vmatprep.subr.bf16.mxu0 0
  %142 = vmatpush1.bf16.msra.mxu0 0
  %143 = vmatprep.subr.bf16.mxu0 0
  %144 = vmatpush1.bf16.msra.mxu0 0
  %145 = vmatprep.subr.bf16.mxu0 0
  %146 = vmatpush1.bf16.msra.mxu0 0
  %147 = vmatprep.subr.bf16.mxu0 0
  %148 = vmatpush1.bf16.msra.mxu0 0
  %149 = vmatprep.subr.bf16.mxu0 0
  %150 = vmatpush1.bf16.msra.mxu0 0
  %151 = vmatprep.mubr.bf16.mxu0 0
  %152 = vmatmul.mubr.bf16.gmra.mrb[0].mxu0 %v117
  %v153 = vpop.f32.mrb[0].mxu0
  %v154 = vadd.f32 %v50, %v153
  %v155 = vpop.f32.mrb[0].mxu0
  %v156 = vpop.f32.mrb[0].mxu0
  %v157 = vadd.f32 %v50, %v156
  %v158 = vpop.f32.mrb[0].mxu0
  %159 = vdwg.mxu0
  %v162 = vcombine.high %v154, %v154
  %v164 = vunpack.c.l.s4 1983009808
  %v165 = vunpack.c.0.s8 %v164
  %v166 = vlaneseq
  %v167 = vshrl.u32 %v166, 7
  %v168 = vsub.s32 %v165, %v167
  %v169 = vrot.slane %v154, %v168
  %v171 = vunpack.c.l.s4 1983009808
  %v172 = vunpack.c.0.s8 %v171
  %v173 = vlaneseq
  %v174 = vshrl.u32 %v173, 7
  %v175 = vsub.s32 %v172, %v174
  %v176 = vrot.slane %v162, %v175
  %v177 = vcombine.high %v169, %v169
  %v178 = vcombine.high %v176, %v176
  %v179 = vcombine.high %v157, %v157
  %v181 = vunpack.c.l.s4 1983009808
  %v182 = vunpack.c.0.s8 %v181
  %v183 = vlaneseq
  %v184 = vshrl.u32 %v183, 7
  %v185 = vsub.s32 %v182, %v184
  %v186 = vrot.slane %v157, %v185
  %v188 = vunpack.c.l.s4 1983009808
  %v189 = vunpack.c.0.s8 %v188
  %v190 = vlaneseq
  %v191 = vshrl.u32 %v190, 7
  %v192 = vsub.s32 %v189, %v191
  %v193 = vrot.slane %v179, %v192
  %v194 = vcombine.high %v186, %v186
  %v195 = vcombine.high %v193, %v193
  %v204 = vld [vmem:[%s4] sm:$0xf]
  %v205 = vld [vmem:[%s4 + $0x4] sm:$0xf]
  %v206 = vld [vmem:[%s6] sm:$0x1]
  %v208 = vlaneseq
  %v209 = vshrl.u32 %v208, 7
  %v210 = vsub.s32 0, %v209
  %v211 = vrot.slane %v206, %v210
  %v215 = vunpack.c.l.b16 %v204
  %v216 = vunpack.c.l.b16 %v205
  %v217 = vpack.c.b16 %v216, %v215
  %219 = vmatprep.subr.bf16.mxu0 0
  %220 = vmatpush1.bf16.msra.mxu0 %v217
  %221 = vmatprep.subr.bf16.mxu0 0
  %222 = vmatpush1.bf16.msra.mxu0 0
  %223 = vmatprep.subr.bf16.mxu0 0
  %224 = vmatpush1.bf16.msra.mxu0 0
  %225 = vmatprep.subr.bf16.mxu0 0
  %226 = vmatpush1.bf16.msra.mxu0 0
  %227 = vmatprep.subr.bf16.mxu0 0
  %228 = vmatpush1.bf16.msra.mxu0 0
  %229 = vmatprep.subr.bf16.mxu0 0
  %230 = vmatpush1.bf16.msra.mxu0 0
  %231 = vmatprep.subr.bf16.mxu0 0
  %232 = vmatpush1.bf16.msra.mxu0 0
  %233 = vmatprep.subr.bf16.mxu0 0
  %234 = vmatpush1.bf16.msra.mxu0 0
  %235 = vmatprep.subr.bf16.mxu0 0
  %236 = vmatpush1.bf16.msra.mxu0 0
  %237 = vmatprep.subr.bf16.mxu0 0
  %238 = vmatpush1.bf16.msra.mxu0 0
  %239 = vmatprep.subr.bf16.mxu0 0
  %240 = vmatpush1.bf16.msra.mxu0 0
  %241 = vmatprep.subr.bf16.mxu0 0
  %242 = vmatpush1.bf16.msra.mxu0 0
  %243 = vmatprep.subr.bf16.mxu0 0
  %244 = vmatpush1.bf16.msra.mxu0 0
  %245 = vmatprep.subr.bf16.mxu0 0
  %246 = vmatpush1.bf16.msra.mxu0 0
  %247 = vmatprep.subr.bf16.mxu0 0
  %248 = vmatpush1.bf16.msra.mxu0 0
  %249 = vmatprep.subr.bf16.mxu0 0
  %250 = vmatpush1.bf16.msra.mxu0 0
  %251 = vmatprep.mubr.bf16.mxu0 0
  %252 = vmatmul.mubr.bf16.gmra.mrb[0].mxu0 %v117
  %v253 = vpop.f32.mrb[0].mxu0
  %v254 = vadd.f32 %v211, %v253
  %v255 = vpop.f32.mrb[0].mxu0
  %v256 = vpop.f32.mrb[0].mxu0
  %v257 = vadd.f32 %v211, %v256
  %v258 = vpop.f32.mrb[0].mxu0
  %259 = vdwg.mxu0
  %v262 = vcombine.high %v254, %v254
  %v264 = vunpack.c.l.s4 1983009808
  %v265 = vunpack.c.0.s8 %v264
  %v266 = vlaneseq
  %v267 = vshrl.u32 %v266, 7
  %v268 = vsub.s32 %v265, %v267
  %v269 = vrot.slane %v254, %v268
  %v271 = vunpack.c.l.s4 1983009808
  %v272 = vunpack.c.0.s8 %v271
  %v273 = vlaneseq
  %v274 = vshrl.u32 %v273, 7
  %v275 = vsub.s32 %v272, %v274
  %v276 = vrot.slane %v262, %v275
  %v277 = vcombine.high %v269, %v269
  %v278 = vcombine.high %v276, %v276
  %v279 = vcombine.high %v257, %v257
  %v281 = vunpack.c.l.s4 1983009808
  %v282 = vunpack.c.0.s8 %v281
  %v283 = vlaneseq
  %v284 = vshrl.u32 %v283, 7
  %v285 = vsub.s32 %v282, %v284
  %v286 = vrot.slane %v257, %v285
  %v288 = vunpack.c.l.s4 1983009808
  %v289 = vunpack.c.0.s8 %v288
  %v290 = vlaneseq
  %v291 = vshrl.u32 %v290, 7
  %v292 = vsub.s32 %v289, %v291
  %v293 = vrot.slane %v279, %v292
  %v294 = vcombine.high %v286, %v286
  %v295 = vcombine.high %v293, %v293
  %v304 = vld [vmem:[%s2] sm:$0xf]
  %v305 = vld [vmem:[%s2 + $0x4] sm:$0xf]
  %v306 = vld [vmem:[%s2 + $0x8] sm:$0xf]
  %v307 = vld [vmem:[%s2 + $0xc] sm:$0xf]
  %v308 = vld [vmem:[%s5] sm:$0xf]
  %v309 = vld [vmem:[%s5 + $0x4] sm:$0xf]
  %v310 = vld [vmem:[%s5 + $0x8] sm:$0xf]
  %v311 = vld [vmem:[%s5 + $0xc] sm:$0xf]
  %v316 = vunpack.c.l.b16 %v304
  %v317 = vunpack.c.l.b16 %v305
  %v318 = vunpack.c.l.b16 %v306
  %v319 = vunpack.c.l.b16 %v307
  %v320 = vpack.c.b16 %v317, %v316
  %v321 = vpack.c.b16 %v319, %v318
  %vm324 = vcmask 261120
  %v326 = vsel %vm324, 0, 0
  %328 = vmatprep.subr.bf16.mxu0 0
  %329 = vmatpush1.bf16.msra.mxu0 %v320
  %330 = vmatprep.subr.bf16.mxu0 0
  %331 = vmatpush1.bf16.msra.mxu0 %v321
  %332 = vmatprep.subr.bf16.mxu0 0
  %333 = vmatpush1.bf16.msra.mxu0 0
  %334 = vmatprep.subr.bf16.mxu0 0
  %335 = vmatpush1.bf16.msra.mxu0 0
  %336 = vmatprep.subr.bf16.mxu0 0
  %337 = vmatpush1.bf16.msra.mxu0 0
  %338 = vmatprep.subr.bf16.mxu0 0
  %339 = vmatpush1.bf16.msra.mxu0 0
  %340 = vmatprep.subr.bf16.mxu0 0
  %341 = vmatpush1.bf16.msra.mxu0 0
  %342 = vmatprep.subr.bf16.mxu0 0
  %343 = vmatpush1.bf16.msra.mxu0 0
  %344 = vmatprep.subr.bf16.mxu0 0
  %345 = vmatpush1.bf16.msra.mxu0 0
  %346 = vmatprep.subr.bf16.mxu0 0
  %347 = vmatpush1.bf16.msra.mxu0 0
  %348 = vmatprep.subr.bf16.mxu0 0
  %349 = vmatpush1.bf16.msra.mxu0 0
  %350 = vmatprep.subr.bf16.mxu0 0
  %351 = vmatpush1.bf16.msra.mxu0 0
  %352 = vmatprep.subr.bf16.mxu0 0
  %353 = vmatpush1.bf16.msra.mxu0 0
  %354 = vmatprep.subr.bf16.mxu0 0
  %355 = vmatpush1.bf16.msra.mxu0 0
  %356 = vmatprep.subr.bf16.mxu0 0
  %357 = vmatpush1.bf16.msra.mxu0 0
  %358 = vmatprep.subr.bf16.mxu0 0
  %359 = vmatpush1.bf16.msra.mxu0 0
  %360 = vmatprep.mubr.bf16.mxu0 0
  %361 = vmatmul.mubr.bf16.gmra.mrb[0].mxu0 %v326
  %v362 = vpop.f32.mrb[0].mxu0
  %v363 = vadd.f32 0.0, %v362
  %v364 = vpop.f32.mrb[0].mxu0
  %v365 = vpop.f32.mrb[0].mxu0
  %v366 = vpop.f32.mrb[0].mxu0
  %367 = vdwg.mxu0
  %v368 = vadd.f32 %v169, %v363
  %v369 = vxor.u32 %v368, 2147483648
  %v370 = vmul.f32 %v369, 1.442695
  %v371 = vpow.pop %v370
  %v372 = vadd.f32 %v371, 1.0
  %v373 = vrcp.pop %v372
  %v374 = vmul.f32 1.0, %v373
  %v375 = vtanh.pop %v368
  %v376 = vmul.f32 %v374, 0.0
  %378 = vrot.lane.b32.xlu0 %v375, 64
  %v379 = vpop.permute.xlu0 %378
  %v381 = vmul.f32 %v374, %v379
  %383 = vrot.lane.b32.xlu0 %v381, 32
  %v384 = vpop.permute.xlu0 %383
  %v386 = vadd.f32 %v376, %v384
  %v387 = vtanh.pop %v386
  %389 = vrot.lane.b32.xlu0 %v387, 64
  %v390 = vpop.permute.xlu0 %389
  %v392 = vmul.f32 %v374, %v390
  %v397 = vunpack.c.l.b16 %v308
  %v398 = vunpack.c.l.b16 %v309
  %v399 = vunpack.c.l.b16 %v310
  %v400 = vunpack.c.l.b16 %v311
  %v401 = vpack.c.b16 %v398, %v397
  %v402 = vpack.c.b16 %v400, %v399
  %405 = vmatprep.subr.bf16.mxu0 0
  %406 = vmatpush1.bf16.msra.mxu0 %v401
  %407 = vmatprep.subr.bf16.mxu0 0
  %408 = vmatpush1.bf16.msra.mxu0 %v402
  %409 = vmatprep.subr.bf16.mxu0 0
  %410 = vmatpush1.bf16.msra.mxu0 0
  %411 = vmatprep.subr.bf16.mxu0 0
  %412 = vmatpush1.bf16.msra.mxu0 0
  %413 = vmatprep.subr.bf16.mxu0 0
  %414 = vmatpush1.bf16.msra.mxu0 0
  %415 = vmatprep.subr.bf16.mxu0 0
  %416 = vmatpush1.bf16.msra.mxu0 0
  %417 = vmatprep.subr.bf16.mxu0 0
  %418 = vmatpush1.bf16.msra.mxu0 0
  %419 = vmatprep.subr.bf16.mxu0 0
  %420 = vmatpush1.bf16.msra.mxu0 0
  %421 = vmatprep.subr.bf16.mxu0 0
  %422 = vmatpush1.bf16.msra.mxu0 0
  %423 = vmatprep.subr.bf16.mxu0 0
  %424 = vmatpush1.bf16.msra.mxu0 0
  %425 = vmatprep.subr.bf16.mxu0 0
  %426 = vmatpush1.bf16.msra.mxu0 0
  %427 = vmatprep.subr.bf16.mxu0 0
  %428 = vmatpush1.bf16.msra.mxu0 0
  %429 = vmatprep.subr.bf16.mxu0 0
  %430 = vmatpush1.bf16.msra.mxu0 0
  %431 = vmatprep.subr.bf16.mxu0 0
  %432 = vmatpush1.bf16.msra.mxu0 0
  %433 = vmatprep.subr.bf16.mxu0 0
  %434 = vmatpush1.bf16.msra.mxu0 0
  %435 = vmatprep.subr.bf16.mxu0 0
  %436 = vmatpush1.bf16.msra.mxu0 0
  %437 = vmatprep.mubr.bf16.mxu0 0
  %438 = vmatmul.mubr.bf16.gmra.mrb[0].mxu0 %v326
  %v439 = vpop.f32.mrb[0].mxu0
  %v440 = vadd.f32 0.0, %v439
  %v441 = vpop.f32.mrb[0].mxu0
  %v442 = vpop.f32.mrb[0].mxu0
  %v443 = vpop.f32.mrb[0].mxu0
  %444 = vdwg.mxu0
  %v445 = vadd.f32 %v295, %v440
  %v446 = vxor.u32 %v445, 2147483648
  %v447 = vmul.f32 %v446, 1.442695
  %v448 = vpow.pop %v447
  %v449 = vadd.f32 %v448, 1.0
  %v450 = vrcp.pop %v449
  %v451 = vmul.f32 1.0, %v450
  %v452 = vtanh.pop %v445
  %v453 = vmul.f32 %v451, 0.0
  %455 = vrot.lane.b32.xlu0 %v452, 64
  %v456 = vpop.permute.xlu0 %455
  %v458 = vmul.f32 %v451, %v456
  %460 = vrot.lane.b32.xlu0 %v458, 32
  %v461 = vpop.permute.xlu0 %460
  %v463 = vadd.f32 %v453, %v461
  %v464 = vtanh.pop %v463
  %466 = vrot.lane.b32.xlu0 %v464, 64
  %v467 = vpop.permute.xlu0 %466
  %v469 = vmul.f32 %v451, %v467
  %v472 = vunpack.c.l.s4 1983009808
  %v473 = vunpack.c.0.s8 %v472
  %v474 = vlaneseq
  %v475 = vshrl.u32 %v474, 7
  %v476 = vsub.s32 %v473, %v475
  %v477 = vrot.slane %v392, %v476
  %478 = vrot.lane.b32.xlu0 %v477, 32
  %v479 = vpop.permute.xlu0 %478
  %vm481 = vcmask 254976
  %482 = vst.msk [vmem:[#allocation2] sm:$0x3] %vm481, %v479
  %v485 = vunpack.c.l.s4 1983009808
  %v486 = vunpack.c.0.s8 %v485
  %v487 = vlaneseq
  %v488 = vshrl.u32 %v487, 7
  %v489 = vsub.s32 %v486, %v488
  %v490 = vrot.slane %v469, %v489
  %491 = vrot.lane.b32.xlu0 %v490, 32
  %v492 = vpop.permute.xlu0 %491
  %s494 = scalar_lea.vmem [#allocation3], 14
  %495 = vst.msk [vmem:[%s494] sm:$0x3] %vm481, %v492
  %v496 = vpack.c.bf16 %v392, %v392
  %498 = vrot.lane.b32.xlu0 %v496, 32
  %v499 = vpop.permute.xlu0 %498
  %v501 = vsel %vm324, %v499, 0
  %503 = vmatprep.subr.bf16.mxu0 0
  %504 = vmatpush1.bf16.msra.mxu0 %v320
  %505 = vmatprep.subr.bf16.mxu0 0
  %506 = vmatpush1.bf16.msra.mxu0 %v321
  %507 = vmatprep.subr.bf16.mxu0 0
  %508 = vmatpush1.bf16.msra.mxu0 0
  %509 = vmatprep.subr.bf16.mxu0 0
  %510 = vmatpush1.bf16.msra.mxu0 0
  %511 = vmatprep.subr.bf16.mxu0 0
  %512 = vmatpush1.bf16.msra.mxu0 0
  %513 = vmatprep.subr.bf16.mxu0 0
  %514 = vmatpush1.bf16.msra.mxu0 0
  %515 = vmatprep.subr.bf16.mxu0 0
  %516 = vmatpush1.bf16.msra.mxu0 0
  %517 = vmatprep.subr.bf16.mxu0 0
  %518 = vmatpush1.bf16.msra.mxu0 0
  %519 = vmatprep.subr.bf16.mxu0 0
  %520 = vmatpush1.bf16.msra.mxu0 0
  %521 = vmatprep.subr.bf16.mxu0 0
  %522 = vmatpush1.bf16.msra.mxu0 0
  %523 = vmatprep.subr.bf16.mxu0 0
  %524 = vmatpush1.bf16.msra.mxu0 0
  %525 = vmatprep.subr.bf16.mxu0 0
  %526 = vmatpush1.bf16.msra.mxu0 0
  %527 = vmatprep.subr.bf16.mxu0 0
  %528 = vmatpush1.bf16.msra.mxu0 0
  %529 = vmatprep.subr.bf16.mxu0 0
  %530 = vmatpush1.bf16.msra.mxu0 0
  %531 = vmatprep.subr.bf16.mxu0 0
  %532 = vmatpush1.bf16.msra.mxu0 0
  %533 = vmatprep.subr.bf16.mxu0 0
  %534 = vmatpush1.bf16.msra.mxu0 0
  %535 = vmatprep.mubr.bf16.mxu0 0
  %536 = vmatmul.mubr.bf16.gmra.mrb[0].mxu0 %v501
  %v537 = vpop.f32.mrb[0].mxu0
  %v538 = vadd.f32 0.0, %v537
  %v539 = vpop.f32.mrb[0].mxu0
  %v540 = vpop.f32.mrb[0].mxu0
  %v541 = vpop.f32.mrb[0].mxu0
  %542 = vdwg.mxu0
  %v543 = vadd.f32 %v177, %v538
  %v544 = vxor.u32 %v543, 2147483648
  %v545 = vmul.f32 %v544, 1.442695
  %v546 = vpow.pop %v545
  %v547 = vadd.f32 %v546, 1.0
  %v548 = vrcp.pop %v547
  %v549 = vmul.f32 1.0, %v548
  %v550 = vtanh.pop %v543
  %v551 = vmul.f32 %v549, %v386
  %553 = vrot.lane.b32.xlu0 %v550, 64
  %v554 = vpop.permute.xlu0 %553
  %v556 = vmul.f32 %v549, %v554
  %558 = vrot.lane.b32.xlu0 %v556, 32
  %v559 = vpop.permute.xlu0 %558
  %v561 = vadd.f32 %v551, %v559
  %v562 = vtanh.pop %v561
  %564 = vrot.lane.b32.xlu0 %v562, 64
  %v565 = vpop.permute.xlu0 %564
  %v567 = vmul.f32 %v549, %v565
  %v568 = vpack.c.bf16 %v469, %v469
  %570 = vrot.lane.b32.xlu0 %v568, 32
  %v571 = vpop.permute.xlu0 %570
  %v573 = vsel %vm324, %v571, 0
  %575 = vmatprep.subr.bf16.mxu0 0
  %576 = vmatpush1.bf16.msra.mxu0 %v401
  %577 = vmatprep.subr.bf16.mxu0 0
  %578 = vmatpush1.bf16.msra.mxu0 %v402
  %579 = vmatprep.subr.bf16.mxu0 0
  %580 = vmatpush1.bf16.msra.mxu0 0
  %581 = vmatprep.subr.bf16.mxu0 0
  %582 = vmatpush1.bf16.msra.mxu0 0
  %583 = vmatprep.subr.bf16.mxu0 0
  %584 = vmatpush1.bf16.msra.mxu0 0
  %585 = vmatprep.subr.bf16.mxu0 0
  %586 = vmatpush1.bf16.msra.mxu0 0
  %587 = vmatprep.subr.bf16.mxu0 0
  %588 = vmatpush1.bf16.msra.mxu0 0
  %589 = vmatprep.subr.bf16.mxu0 0
  %590 = vmatpush1.bf16.msra.mxu0 0
  %591 = vmatprep.subr.bf16.mxu0 0
  %592 = vmatpush1.bf16.msra.mxu0 0
  %593 = vmatprep.subr.bf16.mxu0 0
  %594 = vmatpush1.bf16.msra.mxu0 0
  %595 = vmatprep.subr.bf16.mxu0 0
  %596 = vmatpush1.bf16.msra.mxu0 0
  %597 = vmatprep.subr.bf16.mxu0 0
  %598 = vmatpush1.bf16.msra.mxu0 0
  %599 = vmatprep.subr.bf16.mxu0 0
  %600 = vmatpush1.bf16.msra.mxu0 0
  %601 = vmatprep.subr.bf16.mxu0 0
  %602 = vmatpush1.bf16.msra.mxu0 0
  %603 = vmatprep.subr.bf16.mxu0 0
  %604 = vmatpush1.bf16.msra.mxu0 0
  %605 = vmatprep.subr.bf16.mxu0 0
  %606 = vmatpush1.bf16.msra.mxu0 0
  %607 = vmatprep.mubr.bf16.mxu0 0
  %608 = vmatmul.mubr.bf16.gmra.mrb[0].mxu0 %v573
  %v609 = vpop.f32.mrb[0].mxu0
  %v610 = vadd.f32 0.0, %v609
  %v611 = vpop.f32.mrb[0].mxu0
  %v612 = vpop.f32.mrb[0].mxu0
  %v613 = vpop.f32.mrb[0].mxu0
  %614 = vdwg.mxu0
  %v615 = vadd.f32 %v293, %v610
  %v616 = vxor.u32 %v615, 2147483648
  %v617 = vmul.f32 %v616, 1.442695
  %v618 = vpow.pop %v617
  %v619 = vadd.f32 %v618, 1.0
  %v620 = vrcp.pop %v619
  %v621 = vmul.f32 1.0, %v620
  %v622 = vtanh.pop %v615
  %v623 = vmul.f32 %v621, %v463
  %625 = vrot.lane.b32.xlu0 %v622, 64
  %v626 = vpop.permute.xlu0 %625
  %v628 = vmul.f32 %v621, %v626
  %630 = vrot.lane.b32.xlu0 %v628, 32
  %v631 = vpop.permute.xlu0 %630
  %v633 = vadd.f32 %v623, %v631
  %v634 = vtanh.pop %v633
  %636 = vrot.lane.b32.xlu0 %v634, 64
  %v637 = vpop.permute.xlu0 %636
  %v639 = vmul.f32 %v621, %v637
  %v642 = vunpack.c.l.s4 1983009808
  %v643 = vunpack.c.0.s8 %v642
  %v644 = vlaneseq
  %v645 = vshrl.u32 %v644, 7
  %v646 = vsub.s32 %v643, %v645
  %v647 = vrot.slane %v567, %v646
  %648 = vrot.lane.b32.xlu0 %v647, 32
  %v649 = vpop.permute.xlu0 %648
  %s651 = scalar_lea.vmem [#allocation2], 2
  %652 = vst.msk [vmem:[%s651] sm:$0x3] %vm481, %v649
  %v655 = vunpack.c.l.s4 1983009808
  %v656 = vunpack.c.0.s8 %v655
  %v657 = vlaneseq
  %v658 = vshrl.u32 %v657, 7
  %v659 = vsub.s32 %v656, %v658
  %v660 = vrot.slane %v639, %v659
  %661 = vrot.lane.b32.xlu0 %v660, 32
  %v662 = vpop.permute.xlu0 %661
  %s664 = scalar_lea.vmem [#allocation3], 12
  %665 = vst.msk [vmem:[%s664] sm:$0x3] %vm481, %v662
  %v666 = vpack.c.bf16 %v567, %v567
  %668 = vrot.lane.b32.xlu0 %v666, 32
  %v669 = vpop.permute.xlu0 %668
  %v671 = vsel %vm324, %v669, 0
  %673 = vmatprep.subr.bf16.mxu0 0
  %674 = vmatpush1.bf16.msra.mxu0 %v320
  %675 = vmatprep.subr.bf16.mxu0 0
  %676 = vmatpush1.bf16.msra.mxu0 %v321
  %677 = vmatprep.subr.bf16.mxu0 0
  %678 = vmatpush1.bf16.msra.mxu0 0
  %679 = vmatprep.subr.bf16.mxu0 0
  %680 = vmatpush1.bf16.msra.mxu0 0
  %681 = vmatprep.subr.bf16.mxu0 0
  %682 = vmatpush1.bf16.msra.mxu0 0
  %683 = vmatprep.subr.bf16.mxu0 0
  %684 = vmatpush1.bf16.msra.mxu0 0
  %685 = vmatprep.subr.bf16.mxu0 0
  %686 = vmatpush1.bf16.msra.mxu0 0
  %687 = vmatprep.subr.bf16.mxu0 0
  %688 = vmatpush1.bf16.msra.mxu0 0
  %689 = vmatprep.subr.bf16.mxu0 0
  %690 = vmatpush1.bf16.msra.mxu0 0
  %691 = vmatprep.subr.bf16.mxu0 0
  %692 = vmatpush1.bf16.msra.mxu0 0
  %693 = vmatprep.subr.bf16.mxu0 0
  %694 = vmatpush1.bf16.msra.mxu0 0
  %695 = vmatprep.subr.bf16.mxu0 0
  %696 = vmatpush1.bf16.msra.mxu0 0
  %697 = vmatprep.subr.bf16.mxu0 0
  %698 = vmatpush1.bf16.msra.mxu0 0
  %699 = vmatprep.subr.bf16.mxu0 0
  %700 = vmatpush1.bf16.msra.mxu0 0
  %701 = vmatprep.subr.bf16.mxu0 0
  %702 = vmatpush1.bf16.msra.mxu0 0
  %703 = vmatprep.subr.bf16.mxu0 0
  %704 = vmatpush1.bf16.msra.mxu0 0
  %705 = vmatprep.mubr.bf16.mxu0 0
  %706 = vmatmul.mubr.bf16.gmra.mrb[0].mxu0 %v671
  %v707 = vpop.f32.mrb[0].mxu0
  %v708 = vadd.f32 0.0, %v707
  %v709 = vpop.f32.mrb[0].mxu0
  %v710 = vpop.f32.mrb[0].mxu0
  %v711 = vpop.f32.mrb[0].mxu0
  %712 = vdwg.mxu0
  %v713 = vadd.f32 %v176, %v708
  %v714 = vxor.u32 %v713, 2147483648
  %v715 = vmul.f32 %v714, 1.442695
  %v716 = vpow.pop %v715
  %v717 = vadd.f32 %v716, 1.0
  %v718 = vrcp.pop %v717
  %v719 = vmul.f32 1.0, %v718
  %v720 = vtanh.pop %v713
  %v721 = vmul.f32 %v719, %v561
  %723 = vrot.lane.b32.xlu0 %v720, 64
  %v724 = vpop.permute.xlu0 %723
  %v726 = vmul.f32 %v719, %v724
  %728 = vrot.lane.b32.xlu0 %v726, 32
  %v729 = vpop.permute.xlu0 %728
  %v731 = vadd.f32 %v721, %v729
  %v732 = vtanh.pop %v731
  %734 = vrot.lane.b32.xlu0 %v732, 64
  %v735 = vpop.permute.xlu0 %734
  %v737 = vmul.f32 %v719, %v735
  %v738 = vpack.c.bf16 %v639, %v639
  %740 = vrot.lane.b32.xlu0 %v738, 32
  %v741 = vpop.permute.xlu0 %740
  %v743 = vsel %vm324, %v741, 0
  %745 = vmatprep.subr.bf16.mxu0 0
  %746 = vmatpush1.bf16.msra.mxu0 %v401
  %747 = vmatprep.subr.bf16.mxu0 0
  %748 = vmatpush1.bf16.msra.mxu0 %v402
  %749 = vmatprep.subr.bf16.mxu0 0
  %750 = vmatpush1.bf16.msra.mxu0 0
  %751 = vmatprep.subr.bf16.mxu0 0
  %752 = vmatpush1.bf16.msra.mxu0 0
  %753 = vmatprep.subr.bf16.mxu0 0
  %754 = vmatpush1.bf16.msra.mxu0 0
  %755 = vmatprep.subr.bf16.mxu0 0
  %756 = vmatpush1.bf16.msra.mxu0 0
  %757 = vmatprep.subr.bf16.mxu0 0
  %758 = vmatpush1.bf16.msra.mxu0 0
  %759 = vmatprep.subr.bf16.mxu0 0
  %760 = vmatpush1.bf16.msra.mxu0 0
  %761 = vmatprep.subr.bf16.mxu0 0
  %762 = vmatpush1.bf16.msra.mxu0 0
  %763 = vmatprep.subr.bf16.mxu0 0
  %764 = vmatpush1.bf16.msra.mxu0 0
  %765 = vmatprep.subr.bf16.mxu0 0
  %766 = vmatpush1.bf16.msra.mxu0 0
  %767 = vmatprep.subr.bf16.mxu0 0
  %768 = vmatpush1.bf16.msra.mxu0 0
  %769 = vmatprep.subr.bf16.mxu0 0
  %770 = vmatpush1.bf16.msra.mxu0 0
  %771 = vmatprep.subr.bf16.mxu0 0
  %772 = vmatpush1.bf16.msra.mxu0 0
  %773 = vmatprep.subr.bf16.mxu0 0
  %774 = vmatpush1.bf16.msra.mxu0 0
  %775 = vmatprep.subr.bf16.mxu0 0
  %776 = vmatpush1.bf16.msra.mxu0 0
  %777 = vmatprep.mubr.bf16.mxu0 0
  %778 = vmatmul.mubr.bf16.gmra.mrb[0].mxu0 %v743
  %v779 = vpop.f32.mrb[0].mxu0
  %v780 = vadd.f32 0.0, %v779
  %v781 = vpop.f32.mrb[0].mxu0
  %v782 = vpop.f32.mrb[0].mxu0
  %v783 = vpop.f32.mrb[0].mxu0
  %784 = vdwg.mxu0
  %v785 = vadd.f32 %v294, %v780
  %v786 = vxor.u32 %v785, 2147483648
  %v787 = vmul.f32 %v786, 1.442695
  %v788 = vpow.pop %v787
  %v789 = vadd.f32 %v788, 1.0
  %v790 = vrcp.pop %v789
  %v791 = vmul.f32 1.0, %v790
  %v792 = vtanh.pop %v785
  %v793 = vmul.f32 %v791, %v633
  %795 = vrot.lane.b32.xlu0 %v792, 64
  %v796 = vpop.permute.xlu0 %795
  %v798 = vmul.f32 %v791, %v796
  %800 = vrot.lane.b32.xlu0 %v798, 32
  %v801 = vpop.permute.xlu0 %800
  %v803 = vadd.f32 %v793, %v801
  %v804 = vtanh.pop %v803
  %806 = vrot.lane.b32.xlu0 %v804, 64
  %v807 = vpop.permute.xlu0 %806
  %v809 = vmul.f32 %v791, %v807
  %v812 = vunpack.c.l.s4 1983009808
  %v813 = vunpack.c.0.s8 %v812
  %v814 = vlaneseq
  %v815 = vshrl.u32 %v814, 7
  %v816 = vsub.s32 %v813, %v815
  %v817 = vrot.slane %v737, %v816
  %818 = vrot.lane.b32.xlu0 %v817, 32
  %v819 = vpop.permute.xlu0 %818
  %s821 = scalar_lea.vmem [#allocation2], 4
  %822 = vst.msk [vmem:[%s821] sm:$0x3] %vm481, %v819
  %v825 = vunpack.c.l.s4 1983009808
  %v826 = vunpack.c.0.s8 %v825
  %v827 = vlaneseq
  %v828 = vshrl.u32 %v827, 7
  %v829 = vsub.s32 %v826, %v828
  %v830 = vrot.slane %v809, %v829
  %831 = vrot.lane.b32.xlu0 %v830, 32
  %v832 = vpop.permute.xlu0 %831
  %s834 = scalar_lea.vmem [#allocation3], 10
  %835 = vst.msk [vmem:[%s834] sm:$0x3] %vm481, %v832
  %v836 = vpack.c.bf16 %v737, %v737
  %838 = vrot.lane.b32.xlu0 %v836, 32
  %v839 = vpop.permute.xlu0 %838
  %v841 = vsel %vm324, %v839, 0
  %843 = vmatprep.subr.bf16.mxu0 0
  %844 = vmatpush1.bf16.msra.mxu0 %v320
  %845 = vmatprep.subr.bf16.mxu0 0
  %846 = vmatpush1.bf16.msra.mxu0 %v321
  %847 = vmatprep.subr.bf16.mxu0 0
  %848 = vmatpush1.bf16.msra.mxu0 0
  %849 = vmatprep.subr.bf16.mxu0 0
  %850 = vmatpush1.bf16.msra.mxu0 0
  %851 = vmatprep.subr.bf16.mxu0 0
  %852 = vmatpush1.bf16.msra.mxu0 0
  %853 = vmatprep.subr.bf16.mxu0 0
  %854 = vmatpush1.bf16.msra.mxu0 0
  %855 = vmatprep.subr.bf16.mxu0 0
  %856 = vmatpush1.bf16.msra.mxu0 0
  %857 = vmatprep.subr.bf16.mxu0 0
  %858 = vmatpush1.bf16.msra.mxu0 0
  %859 = vmatprep.subr.bf16.mxu0 0
  %860 = vmatpush1.bf16.msra.mxu0 0
  %861 = vmatprep.subr.bf16.mxu0 0
  %862 = vmatpush1.bf16.msra.mxu0 0
  %863 = vmatprep.subr.bf16.mxu0 0
  %864 = vmatpush1.bf16.msra.mxu0 0
  %865 = vmatprep.subr.bf16.mxu0 0
  %866 = vmatpush1.bf16.msra.mxu0 0
  %867 = vmatprep.subr.bf16.mxu0 0
  %868 = vmatpush1.bf16.msra.mxu0 0
  %869 = vmatprep.subr.bf16.mxu0 0
  %870 = vmatpush1.bf16.msra.mxu0 0
  %871 = vmatprep.subr.bf16.mxu0 0
  %872 = vmatpush1.bf16.msra.mxu0 0
  %873 = vmatprep.subr.bf16.mxu0 0
  %874 = vmatpush1.bf16.msra.mxu0 0
  %875 = vmatprep.mubr.bf16.mxu0 0
  %876 = vmatmul.mubr.bf16.gmra.mrb[0].mxu0 %v841
  %v877 = vpop.f32.mrb[0].mxu0
  %v878 = vadd.f32 0.0, %v877
  %v879 = vpop.f32.mrb[0].mxu0
  %v880 = vpop.f32.mrb[0].mxu0
  %v881 = vpop.f32.mrb[0].mxu0
  %882 = vdwg.mxu0
  %v883 = vadd.f32 %v178, %v878
  %v884 = vxor.u32 %v883, 2147483648
  %v885 = vmul.f32 %v884, 1.442695
  %v886 = vpow.pop %v885
  %v887 = vadd.f32 %v886, 1.0
  %v888 = vrcp.pop %v887
  %v889 = vmul.f32 1.0, %v888
  %v890 = vtanh.pop %v883
  %v891 = vmul.f32 %v889, %v731
  %893 = vrot.lane.b32.xlu0 %v890, 64
  %v894 = vpop.permute.xlu0 %893
  %v896 = vmul.f32 %v889, %v894
  %898 = vrot.lane.b32.xlu0 %v896, 32
  %v899 = vpop.permute.xlu0 %898
  %v901 = vadd.f32 %v891, %v899
  %v902 = vtanh.pop %v901
  %904 = vrot.lane.b32.xlu0 %v902, 64
  %v905 = vpop.permute.xlu0 %904
  %v907 = vmul.f32 %v889, %v905
  %v908 = vpack.c.bf16 %v809, %v809
  %910 = vrot.lane.b32.xlu0 %v908, 32
  %v911 = vpop.permute.xlu0 %910
  %v913 = vsel %vm324, %v911, 0
  %915 = vmatprep.subr.bf16.mxu0 0
  %916 = vmatpush1.bf16.msra.mxu0 %v401
  %917 = vmatprep.subr.bf16.mxu0 0
  %918 = vmatpush1.bf16.msra.mxu0 %v402
  %919 = vmatprep.subr.bf16.mxu0 0
  %920 = vmatpush1.bf16.msra.mxu0 0
  %921 = vmatprep.subr.bf16.mxu0 0
  %922 = vmatpush1.bf16.msra.mxu0 0
  %923 = vmatprep.subr.bf16.mxu0 0
  %924 = vmatpush1.bf16.msra.mxu0 0
  %925 = vmatprep.subr.bf16.mxu0 0
  %926 = vmatpush1.bf16.msra.mxu0 0
  %927 = vmatprep.subr.bf16.mxu0 0
  %928 = vmatpush1.bf16.msra.mxu0 0
  %929 = vmatprep.subr.bf16.mxu0 0
  %930 = vmatpush1.bf16.msra.mxu0 0
  %931 = vmatprep.subr.bf16.mxu0 0
  %932 = vmatpush1.bf16.msra.mxu0 0
  %933 = vmatprep.subr.bf16.mxu0 0
  %934 = vmatpush1.bf16.msra.mxu0 0
  %935 = vmatprep.subr.bf16.mxu0 0
  %936 = vmatpush1.bf16.msra.mxu0 0
  %937 = vmatprep.subr.bf16.mxu0 0
  %938 = vmatpush1.bf16.msra.mxu0 0
  %939 = vmatprep.subr.bf16.mxu0 0
  %940 = vmatpush1.bf16.msra.mxu0 0
  %941 = vmatprep.subr.bf16.mxu0 0
  %942 = vmatpush1.bf16.msra.mxu0 0
  %943 = vmatprep.subr.bf16.mxu0 0
  %944 = vmatpush1.bf16.msra.mxu0 0
  %945 = vmatprep.subr.bf16.mxu0 0
  %946 = vmatpush1.bf16.msra.mxu0 0
  %947 = vmatprep.mubr.bf16.mxu0 0
  %948 = vmatmul.mubr.bf16.gmra.mrb[0].mxu0 %v913
  %v949 = vpop.f32.mrb[0].mxu0
  %v950 = vadd.f32 0.0, %v949
  %v951 = vpop.f32.mrb[0].mxu0
  %v952 = vpop.f32.mrb[0].mxu0
  %v953 = vpop.f32.mrb[0].mxu0
  %954 = vdwg.mxu0
  %v955 = vadd.f32 %v286, %v950
  %v956 = vxor.u32 %v955, 2147483648
  %v957 = vmul.f32 %v956, 1.442695
  %v958 = vpow.pop %v957
  %v959 = vadd.f32 %v958, 1.0
  %v960 = vrcp.pop %v959
  %v961 = vmul.f32 1.0, %v960
  %v962 = vtanh.pop %v955
  %v963 = vmul.f32 %v961, %v803
  %965 = vrot.lane.b32.xlu0 %v962, 64
  %v966 = vpop.permute.xlu0 %965
  %v968 = vmul.f32 %v961, %v966
  %970 = vrot.lane.b32.xlu0 %v968, 32
  %v971 = vpop.permute.xlu0 %970
  %v973 = vadd.f32 %v963, %v971
  %v974 = vtanh.pop %v973
  %976 = vrot.lane.b32.xlu0 %v974, 64
  %v977 = vpop.permute.xlu0 %976
  %v979 = vmul.f32 %v961, %v977
  %v982 = vunpack.c.l.s4 1983009808
  %v983 = vunpack.c.0.s8 %v982
  %v984 = vlaneseq
  %v985 = vshrl.u32 %v984, 7
  %v986 = vsub.s32 %v983, %v985
  %v987 = vrot.slane %v907, %v986
  %988 = vrot.lane.b32.xlu0 %v987, 32
  %v989 = vpop.permute.xlu0 %988
  %s991 = scalar_lea.vmem [#allocation2], 6
  %992 = vst.msk [vmem:[%s991] sm:$0x3] %vm481, %v989
  %v995 = vunpack.c.l.s4 1983009808
  %v996 = vunpack.c.0.s8 %v995
  %v997 = vlaneseq
  %v998 = vshrl.u32 %v997, 7
  %v999 = vsub.s32 %v996, %v998
  %v1000 = vrot.slane %v979, %v999
  %1001 = vrot.lane.b32.xlu0 %v1000, 32
  %v1002 = vpop.permute.xlu0 %1001
  %s1004 = scalar_lea.vmem [#allocation3], 8
  %1005 = vst.msk [vmem:[%s1004] sm:$0x3] %vm481, %v1002
  %v1006 = vpack.c.bf16 %v907, %v907
  %1008 = vrot.lane.b32.xlu0 %v1006, 32
  %v1009 = vpop.permute.xlu0 %1008
  %v1011 = vsel %vm324, %v1009, 0
  %1013 = vmatprep.subr.bf16.mxu0 0
  %1014 = vmatpush1.bf16.msra.mxu0 %v320
  %1015 = vmatprep.subr.bf16.mxu0 0
  %1016 = vmatpush1.bf16.msra.mxu0 %v321
  %1017 = vmatprep.subr.bf16.mxu0 0
  %1018 = vmatpush1.bf16.msra.mxu0 0
  %1019 = vmatprep.subr.bf16.mxu0 0
  %1020 = vmatpush1.bf16.msra.mxu0 0
  %1021 = vmatprep.subr.bf16.mxu0 0
  %1022 = vmatpush1.bf16.msra.mxu0 0
  %1023 = vmatprep.subr.bf16.mxu0 0
  %1024 = vmatpush1.bf16.msra.mxu0 0
  %1025 = vmatprep.subr.bf16.mxu0 0
  %1026 = vmatpush1.bf16.msra.mxu0 0
  %1027 = vmatprep.subr.bf16.mxu0 0
  %1028 = vmatpush1.bf16.msra.mxu0 0
  %1029 = vmatprep.subr.bf16.mxu0 0
  %1030 = vmatpush1.bf16.msra.mxu0 0
  %1031 = vmatprep.subr.bf16.mxu0 0
  %1032 = vmatpush1.bf16.msra.mxu0 0
  %1033 = vmatprep.subr.bf16.mxu0 0
  %1034 = vmatpush1.bf16.msra.mxu0 0
  %1035 = vmatprep.subr.bf16.mxu0 0
  %1036 = vmatpush1.bf16.msra.mxu0 0
  %1037 = vmatprep.subr.bf16.mxu0 0
  %1038 = vmatpush1.bf16.msra.mxu0 0
  %1039 = vmatprep.subr.bf16.mxu0 0
  %1040 = vmatpush1.bf16.msra.mxu0 0
  %1041 = vmatprep.subr.bf16.mxu0 0
  %1042 = vmatpush1.bf16.msra.mxu0 0
  %1043 = vmatprep.subr.bf16.mxu0 0
  %1044 = vmatpush1.bf16.msra.mxu0 0
  %1045 = vmatprep.mubr.bf16.mxu0 0
  %1046 = vmatmul.mubr.bf16.gmra.mrb[0].mxu0 %v1011
  %v1047 = vpop.f32.mrb[0].mxu0
  %v1048 = vadd.f32 0.0, %v1047
  %v1049 = vpop.f32.mrb[0].mxu0
  %v1050 = vpop.f32.mrb[0].mxu0
  %v1051 = vpop.f32.mrb[0].mxu0
  %1052 = vdwg.mxu0
  %v1053 = vadd.f32 %v186, %v1048
  %v1054 = vxor.u32 %v1053, 2147483648
  %v1055 = vmul.f32 %v1054, 1.442695
  %v1056 = vpow.pop %v1055
  %v1057 = vadd.f32 %v1056, 1.0
  %v1058 = vrcp.pop %v1057
  %v1059 = vmul.f32 1.0, %v1058
  %v1060 = vtanh.pop %v1053
  %v1061 = vmul.f32 %v1059, %v901
  %1063 = vrot.lane.b32.xlu0 %v1060, 64
  %v1064 = vpop.permute.xlu0 %1063
  %v1066 = vmul.f32 %v1059, %v1064
  %1068 = vrot.lane.b32.xlu0 %v1066, 32
  %v1069 = vpop.permute.xlu0 %1068
  %v1071 = vadd.f32 %v1061, %v1069
  %v1072 = vtanh.pop %v1071
  %1074 = vrot.lane.b32.xlu0 %v1072, 64
  %v1075 = vpop.permute.xlu0 %1074
  %v1077 = vmul.f32 %v1059, %v1075
  %v1078 = vpack.c.bf16 %v979, %v979
  %1080 = vrot.lane.b32.xlu0 %v1078, 32
  %v1081 = vpop.permute.xlu0 %1080
  %v1083 = vsel %vm324, %v1081, 0
  %1085 = vmatprep.subr.bf16.mxu0 0
  %1086 = vmatpush1.bf16.msra.mxu0 %v401
  %1087 = vmatprep.subr.bf16.mxu0 0
  %1088 = vmatpush1.bf16.msra.mxu0 %v402
  %1089 = vmatprep.subr.bf16.mxu0 0
  %1090 = vmatpush1.bf16.msra.mxu0 0
  %1091 = vmatprep.subr.bf16.mxu0 0
  %1092 = vmatpush1.bf16.msra.mxu0 0
  %1093 = vmatprep.subr.bf16.mxu0 0
  %1094 = vmatpush1.bf16.msra.mxu0 0
  %1095 = vmatprep.subr.bf16.mxu0 0
  %1096 = vmatpush1.bf16.msra.mxu0 0
  %1097 = vmatprep.subr.bf16.mxu0 0
  %1098 = vmatpush1.bf16.msra.mxu0 0
  %1099 = vmatprep.subr.bf16.mxu0 0
  %1100 = vmatpush1.bf16.msra.mxu0 0
  %1101 = vmatprep.subr.bf16.mxu0 0
  %1102 = vmatpush1.bf16.msra.mxu0 0
  %1103 = vmatprep.subr.bf16.mxu0 0
  %1104 = vmatpush1.bf16.msra.mxu0 0
  %1105 = vmatprep.subr.bf16.mxu0 0
  %1106 = vmatpush1.bf16.msra.mxu0 0
  %1107 = vmatprep.subr.bf16.mxu0 0
  %1108 = vmatpush1.bf16.msra.mxu0 0
  %1109 = vmatprep.subr.bf16.mxu0 0
  %1110 = vmatpush1.bf16.msra.mxu0 0
  %1111 = vmatprep.subr.bf16.mxu0 0
  %1112 = vmatpush1.bf16.msra.mxu0 0
  %1113 = vmatprep.subr.bf16.mxu0 0
  %1114 = vmatpush1.bf16.msra.mxu0 0
  %1115 = vmatprep.subr.bf16.mxu0 0
  %1116 = vmatpush1.bf16.msra.mxu0 0
  %1117 = vmatprep.mubr.bf16.mxu0 0
  %1118 = vmatmul.mubr.bf16.gmra.mrb[0].mxu0 %v1083
  %v1119 = vpop.f32.mrb[0].mxu0
  %v1120 = vadd.f32 0.0, %v1119
  %v1121 = vpop.f32.mrb[0].mxu0
  %v1122 = vpop.f32.mrb[0].mxu0
  %v1123 = vpop.f32.mrb[0].mxu0
  %1124 = vdwg.mxu0
  %v1125 = vadd.f32 %v278, %v1120
  %v1126 = vxor.u32 %v1125, 2147483648
  %v1127 = vmul.f32 %v1126, 1.442695
  %v1128 = vpow.pop %v1127
  %v1129 = vadd.f32 %v1128, 1.0
  %v1130 = vrcp.pop %v1129
  %v1131 = vmul.f32 1.0, %v1130
  %v1132 = vtanh.pop %v1125
  %v1133 = vmul.f32 %v1131, %v973
  %1135 = vrot.lane.b32.xlu0 %v1132, 64
  %v1136 = vpop.permute.xlu0 %1135
  %v1138 = vmul.f32 %v1131, %v1136
  %1140 = vrot.lane.b32.xlu0 %v1138, 32
  %v1141 = vpop.permute.xlu0 %1140
  %v1143 = vadd.f32 %v1133, %v1141
  %v1144 = vtanh.pop %v1143
  %1146 = vrot.lane.b32.xlu0 %v1144, 64
  %v1147 = vpop.permute.xlu0 %1146
  %v1149 = vmul.f32 %v1131, %v1147
  %v1152 = vunpack.c.l.s4 1983009808
  %v1153 = vunpack.c.0.s8 %v1152
  %v1154 = vlaneseq
  %v1155 = vshrl.u32 %v1154, 7
  %v1156 = vsub.s32 %v1153, %v1155
  %v1157 = vrot.slane %v1077, %v1156
  %1158 = vrot.lane.b32.xlu0 %v1157, 32
  %v1159 = vpop.permute.xlu0 %1158
  %s1161 = scalar_lea.vmem [#allocation2], 8
  %1162 = vst.msk [vmem:[%s1161] sm:$0x3] %vm481, %v1159
  %v1165 = vunpack.c.l.s4 1983009808
  %v1166 = vunpack.c.0.s8 %v1165
  %v1167 = vlaneseq
  %v1168 = vshrl.u32 %v1167, 7
  %v1169 = vsub.s32 %v1166, %v1168
  %v1170 = vrot.slane %v1149, %v1169
  %1171 = vrot.lane.b32.xlu0 %v1170, 32
  %v1172 = vpop.permute.xlu0 %1171
  %s1174 = scalar_lea.vmem [#allocation3], 6
  %1175 = vst.msk [vmem:[%s1174] sm:$0x3] %vm481, %v1172
  %v1176 = vpack.c.bf16 %v1077, %v1077
  %1178 = vrot.lane.b32.xlu0 %v1176, 32
  %v1179 = vpop.permute.xlu0 %1178
  %v1181 = vsel %vm324, %v1179, 0
  %1183 = vmatprep.subr.bf16.mxu0 0
  %1184 = vmatpush1.bf16.msra.mxu0 %v320
  %1185 = vmatprep.subr.bf16.mxu0 0
  %1186 = vmatpush1.bf16.msra.mxu0 %v321
  %1187 = vmatprep.subr.bf16.mxu0 0
  %1188 = vmatpush1.bf16.msra.mxu0 0
  %1189 = vmatprep.subr.bf16.mxu0 0
  %1190 = vmatpush1.bf16.msra.mxu0 0
  %1191 = vmatprep.subr.bf16.mxu0 0
  %1192 = vmatpush1.bf16.msra.mxu0 0
  %1193 = vmatprep.subr.bf16.mxu0 0
  %1194 = vmatpush1.bf16.msra.mxu0 0
  %1195 = vmatprep.subr.bf16.mxu0 0
  %1196 = vmatpush1.bf16.msra.mxu0 0
  %1197 = vmatprep.subr.bf16.mxu0 0
  %1198 = vmatpush1.bf16.msra.mxu0 0
  %1199 = vmatprep.subr.bf16.mxu0 0
  %1200 = vmatpush1.bf16.msra.mxu0 0
  %1201 = vmatprep.subr.bf16.mxu0 0
  %1202 = vmatpush1.bf16.msra.mxu0 0
  %1203 = vmatprep.subr.bf16.mxu0 0
  %1204 = vmatpush1.bf16.msra.mxu0 0
  %1205 = vmatprep.subr.bf16.mxu0 0
  %1206 = vmatpush1.bf16.msra.mxu0 0
  %1207 = vmatprep.subr.bf16.mxu0 0
  %1208 = vmatpush1.bf16.msra.mxu0 0
  %1209 = vmatprep.subr.bf16.mxu0 0
  %1210 = vmatpush1.bf16.msra.mxu0 0
  %1211 = vmatprep.subr.bf16.mxu0 0
  %1212 = vmatpush1.bf16.msra.mxu0 0
  %1213 = vmatprep.subr.bf16.mxu0 0
  %1214 = vmatpush1.bf16.msra.mxu0 0
  %1215 = vmatprep.mubr.bf16.mxu0 0
  %1216 = vmatmul.mubr.bf16.gmra.mrb[0].mxu0 %v1181
  %v1217 = vpop.f32.mrb[0].mxu0
  %v1218 = vadd.f32 0.0, %v1217
  %v1219 = vpop.f32.mrb[0].mxu0
  %v1220 = vpop.f32.mrb[0].mxu0
  %v1221 = vpop.f32.mrb[0].mxu0
  %1222 = vdwg.mxu0
  %v1223 = vadd.f32 %v194, %v1218
  %v1224 = vxor.u32 %v1223, 2147483648
  %v1225 = vmul.f32 %v1224, 1.442695
  %v1226 = vpow.pop %v1225
  %v1227 = vadd.f32 %v1226, 1.0
  %v1228 = vrcp.pop %v1227
  %v1229 = vmul.f32 1.0, %v1228
  %v1230 = vtanh.pop %v1223
  %v1231 = vmul.f32 %v1229, %v1071
  %1233 = vrot.lane.b32.xlu0 %v1230, 64
  %v1234 = vpop.permute.xlu0 %1233
  %v1236 = vmul.f32 %v1229, %v1234
  %1238 = vrot.lane.b32.xlu0 %v1236, 32
  %v1239 = vpop.permute.xlu0 %1238
  %v1241 = vadd.f32 %v1231, %v1239
  %v1242 = vtanh.pop %v1241
  %1244 = vrot.lane.b32.xlu0 %v1242, 64
  %v1245 = vpop.permute.xlu0 %1244
  %v1247 = vmul.f32 %v1229, %v1245
  %v1248 = vpack.c.bf16 %v1149, %v1149
  %1250 = vrot.lane.b32.xlu0 %v1248, 32
  %v1251 = vpop.permute.xlu0 %1250
  %v1253 = vsel %vm324, %v1251, 0
  %1255 = vmatprep.subr.bf16.mxu0 0
  %1256 = vmatpush1.bf16.msra.mxu0 %v401
  %1257 = vmatprep.subr.bf16.mxu0 0
  %1258 = vmatpush1.bf16.msra.mxu0 %v402
  %1259 = vmatprep.subr.bf16.mxu0 0
  %1260 = vmatpush1.bf16.msra.mxu0 0
  %1261 = vmatprep.subr.bf16.mxu0 0
  %1262 = vmatpush1.bf16.msra.mxu0 0
  %1263 = vmatprep.subr.bf16.mxu0 0
  %1264 = vmatpush1.bf16.msra.mxu0 0
  %1265 = vmatprep.subr.bf16.mxu0 0
  %1266 = vmatpush1.bf16.msra.mxu0 0
  %1267 = vmatprep.subr.bf16.mxu0 0
  %1268 = vmatpush1.bf16.msra.mxu0 0
  %1269 = vmatprep.subr.bf16.mxu0 0
  %1270 = vmatpush1.bf16.msra.mxu0 0
  %1271 = vmatprep.subr.bf16.mxu0 0
  %1272 = vmatpush1.bf16.msra.mxu0 0
  %1273 = vmatprep.subr.bf16.mxu0 0
  %1274 = vmatpush1.bf16.msra.mxu0 0
  %1275 = vmatprep.subr.bf16.mxu0 0
  %1276 = vmatpush1.bf16.msra.mxu0 0
  %1277 = vmatprep.subr.bf16.mxu0 0
  %1278 = vmatpush1.bf16.msra.mxu0 0
  %1279 = vmatprep.subr.bf16.mxu0 0
  %1280 = vmatpush1.bf16.msra.mxu0 0
  %1281 = vmatprep.subr.bf16.mxu0 0
  %1282 = vmatpush1.bf16.msra.mxu0 0
  %1283 = vmatprep.subr.bf16.mxu0 0
  %1284 = vmatpush1.bf16.msra.mxu0 0
  %1285 = vmatprep.subr.bf16.mxu0 0
  %1286 = vmatpush1.bf16.msra.mxu0 0
  %1287 = vmatprep.mubr.bf16.mxu0 0
  %1288 = vmatmul.mubr.bf16.gmra.mrb[0].mxu0 %v1253
  %v1289 = vpop.f32.mrb[0].mxu0
  %v1290 = vadd.f32 0.0, %v1289
  %v1291 = vpop.f32.mrb[0].mxu0
  %v1292 = vpop.f32.mrb[0].mxu0
  %v1293 = vpop.f32.mrb[0].mxu0
  %1294 = vdwg.mxu0
  %v1295 = vadd.f32 %v276, %v1290
  %v1296 = vxor.u32 %v1295, 2147483648
  %v1297 = vmul.f32 %v1296, 1.442695
  %v1298 = vpow.pop %v1297
  %v1299 = vadd.f32 %v1298, 1.0
  %v1300 = vrcp.pop %v1299
  %v1301 = vmul.f32 1.0, %v1300
  %v1302 = vtanh.pop %v1295
  %v1303 = vmul.f32 %v1301, %v1143
  %1305 = vrot.lane.b32.xlu0 %v1302, 64
  %v1306 = vpop.permute.xlu0 %1305
  %v1308 = vmul.f32 %v1301, %v1306
  %1310 = vrot.lane.b32.xlu0 %v1308, 32
  %v1311 = vpop.permute.xlu0 %1310
  %v1313 = vadd.f32 %v1303, %v1311
  %v1314 = vtanh.pop %v1313
  %1316 = vrot.lane.b32.xlu0 %v1314, 64
  %v1317 = vpop.permute.xlu0 %1316
  %v1319 = vmul.f32 %v1301, %v1317
  %v1322 = vunpack.c.l.s4 1983009808
  %v1323 = vunpack.c.0.s8 %v1322
  %v1324 = vlaneseq
  %v1325 = vshrl.u32 %v1324, 7
  %v1326 = vsub.s32 %v1323, %v1325
  %v1327 = vrot.slane %v1247, %v1326
  %1328 = vrot.lane.b32.xlu0 %v1327, 32
  %v1329 = vpop.permute.xlu0 %1328
  %s1331 = scalar_lea.vmem [#allocation2], 10
  %1332 = vst.msk [vmem:[%s1331] sm:$0x3] %vm481, %v1329
  %v1335 = vunpack.c.l.s4 1983009808
  %v1336 = vunpack.c.0.s8 %v1335
  %v1337 = vlaneseq
  %v1338 = vshrl.u32 %v1337, 7
  %v1339 = vsub.s32 %v1336, %v1338
  %v1340 = vrot.slane %v1319, %v1339
  %1341 = vrot.lane.b32.xlu0 %v1340, 32
  %v1342 = vpop.permute.xlu0 %1341
  %s1344 = scalar_lea.vmem [#allocation3], 4
  %1345 = vst.msk [vmem:[%s1344] sm:$0x3] %vm481, %v1342
  %v1346 = vpack.c.bf16 %v1247, %v1247
  %1348 = vrot.lane.b32.xlu0 %v1346, 32
  %v1349 = vpop.permute.xlu0 %1348
  %v1351 = vsel %vm324, %v1349, 0
  %1353 = vmatprep.subr.bf16.mxu0 0
  %1354 = vmatpush1.bf16.msra.mxu0 %v320
  %1355 = vmatprep.subr.bf16.mxu0 0
  %1356 = vmatpush1.bf16.msra.mxu0 %v321
  %1357 = vmatprep.subr.bf16.mxu0 0
  %1358 = vmatpush1.bf16.msra.mxu0 0
  %1359 = vmatprep.subr.bf16.mxu0 0
  %1360 = vmatpush1.bf16.msra.mxu0 0
  %1361 = vmatprep.subr.bf16.mxu0 0
  %1362 = vmatpush1.bf16.msra.mxu0 0
  %1363 = vmatprep.subr.bf16.mxu0 0
  %1364 = vmatpush1.bf16.msra.mxu0 0
  %1365 = vmatprep.subr.bf16.mxu0 0
  %1366 = vmatpush1.bf16.msra.mxu0 0
  %1367 = vmatprep.subr.bf16.mxu0 0
  %1368 = vmatpush1.bf16.msra.mxu0 0
  %1369 = vmatprep.subr.bf16.mxu0 0
  %1370 = vmatpush1.bf16.msra.mxu0 0
  %1371 = vmatprep.subr.bf16.mxu0 0
  %1372 = vmatpush1.bf16.msra.mxu0 0
  %1373 = vmatprep.subr.bf16.mxu0 0
  %1374 = vmatpush1.bf16.msra.mxu0 0
  %1375 = vmatprep.subr.bf16.mxu0 0
  %1376 = vmatpush1.bf16.msra.mxu0 0
  %1377 = vmatprep.subr.bf16.mxu0 0
  %1378 = vmatpush1.bf16.msra.mxu0 0
  %1379 = vmatprep.subr.bf16.mxu0 0
  %1380 = vmatpush1.bf16.msra.mxu0 0
  %1381 = vmatprep.subr.bf16.mxu0 0
  %1382 = vmatpush1.bf16.msra.mxu0 0
  %1383 = vmatprep.subr.bf16.mxu0 0
  %1384 = vmatpush1.bf16.msra.mxu0 0
  %1385 = vmatprep.mubr.bf16.mxu0 0
  %1386 = vmatmul.mubr.bf16.gmra.mrb[0].mxu0 %v1351
  %v1387 = vpop.f32.mrb[0].mxu0
  %v1388 = vadd.f32 0.0, %v1387
  %v1389 = vpop.f32.mrb[0].mxu0
  %v1390 = vpop.f32.mrb[0].mxu0
  %v1391 = vpop.f32.mrb[0].mxu0
  %1392 = vdwg.mxu0
  %v1393 = vadd.f32 %v193, %v1388
  %v1394 = vxor.u32 %v1393, 2147483648
  %v1395 = vmul.f32 %v1394, 1.442695
  %v1396 = vpow.pop %v1395
  %v1397 = vadd.f32 %v1396, 1.0
  %v1398 = vrcp.pop %v1397
  %v1399 = vmul.f32 1.0, %v1398
  %v1400 = vtanh.pop %v1393
  %v1401 = vmul.f32 %v1399, %v1241
  %1403 = vrot.lane.b32.xlu0 %v1400, 64
  %v1404 = vpop.permute.xlu0 %1403
  %v1406 = vmul.f32 %v1399, %v1404
  %1408 = vrot.lane.b32.xlu0 %v1406, 32
  %v1409 = vpop.permute.xlu0 %1408
  %v1411 = vadd.f32 %v1401, %v1409
  %v1412 = vtanh.pop %v1411
  %1414 = vrot.lane.b32.xlu0 %v1412, 64
  %v1415 = vpop.permute.xlu0 %1414
  %v1417 = vmul.f32 %v1399, %v1415
  %v1418 = vpack.c.bf16 %v1319, %v1319
  %1420 = vrot.lane.b32.xlu0 %v1418, 32
  %v1421 = vpop.permute.xlu0 %1420
  %v1423 = vsel %vm324, %v1421, 0
  %1425 = vmatprep.subr.bf16.mxu0 0
  %1426 = vmatpush1.bf16.msra.mxu0 %v401
  %1427 = vmatprep.subr.bf16.mxu0 0
  %1428 = vmatpush1.bf16.msra.mxu0 %v402
  %1429 = vmatprep.subr.bf16.mxu0 0
  %1430 = vmatpush1.bf16.msra.mxu0 0
  %1431 = vmatprep.subr.bf16.mxu0 0
  %1432 = vmatpush1.bf16.msra.mxu0 0
  %1433 = vmatprep.subr.bf16.mxu0 0
  %1434 = vmatpush1.bf16.msra.mxu0 0
  %1435 = vmatprep.subr.bf16.mxu0 0
  %1436 = vmatpush1.bf16.msra.mxu0 0
  %1437 = vmatprep.subr.bf16.mxu0 0
  %1438 = vmatpush1.bf16.msra.mxu0 0
  %1439 = vmatprep.subr.bf16.mxu0 0
  %1440 = vmatpush1.bf16.msra.mxu0 0
  %1441 = vmatprep.subr.bf16.mxu0 0
  %1442 = vmatpush1.bf16.msra.mxu0 0
  %1443 = vmatprep.subr.bf16.mxu0 0
  %1444 = vmatpush1.bf16.msra.mxu0 0
  %1445 = vmatprep.subr.bf16.mxu0 0
  %1446 = vmatpush1.bf16.msra.mxu0 0
  %1447 = vmatprep.subr.bf16.mxu0 0
  %1448 = vmatpush1.bf16.msra.mxu0 0
  %1449 = vmatprep.subr.bf16.mxu0 0
  %1450 = vmatpush1.bf16.msra.mxu0 0
  %1451 = vmatprep.subr.bf16.mxu0 0
  %1452 = vmatpush1.bf16.msra.mxu0 0
  %1453 = vmatprep.subr.bf16.mxu0 0
  %1454 = vmatpush1.bf16.msra.mxu0 0
  %1455 = vmatprep.subr.bf16.mxu0 0
  %1456 = vmatpush1.bf16.msra.mxu0 0
  %1457 = vmatprep.mubr.bf16.mxu0 0
  %1458 = vmatmul.mubr.bf16.gmra.mrb[0].mxu0 %v1423
  %v1459 = vpop.f32.mrb[0].mxu0
  %v1460 = vadd.f32 0.0, %v1459
  %v1461 = vpop.f32.mrb[0].mxu0
  %v1462 = vpop.f32.mrb[0].mxu0
  %v1463 = vpop.f32.mrb[0].mxu0
  %1464 = vdwg.mxu0
  %v1465 = vadd.f32 %v277, %v1460
  %v1466 = vxor.u32 %v1465, 2147483648
  %v1467 = vmul.f32 %v1466, 1.442695
  %v1468 = vpow.pop %v1467
  %v1469 = vadd.f32 %v1468, 1.0
  %v1470 = vrcp.pop %v1469
  %v1471 = vmul.f32 1.0, %v1470
  %v1472 = vtanh.pop %v1465
  %v1473 = vmul.f32 %v1471, %v1313
  %1475 = vrot.lane.b32.xlu0 %v1472, 64
  %v1476 = vpop.permute.xlu0 %1475
  %v1478 = vmul.f32 %v1471, %v1476
  %1480 = vrot.lane.b32.xlu0 %v1478, 32
  %v1481 = vpop.permute.xlu0 %1480
  %v1483 = vadd.f32 %v1473, %v1481
  %v1484 = vtanh.pop %v1483
  %1486 = vrot.lane.b32.xlu0 %v1484, 64
  %v1487 = vpop.permute.xlu0 %1486
  %v1489 = vmul.f32 %v1471, %v1487
  %v1492 = vunpack.c.l.s4 1983009808
  %v1493 = vunpack.c.0.s8 %v1492
  %v1494 = vlaneseq
  %v1495 = vshrl.u32 %v1494, 7
  %v1496 = vsub.s32 %v1493, %v1495
  %v1497 = vrot.slane %v1417, %v1496
  %1498 = vrot.lane.b32.xlu0 %v1497, 32
  %v1499 = vpop.permute.xlu0 %1498
  %s1501 = scalar_lea.vmem [#allocation2], 12
  %1502 = vst.msk [vmem:[%s1501] sm:$0x3] %vm481, %v1499
  %v1505 = vunpack.c.l.s4 1983009808
  %v1506 = vunpack.c.0.s8 %v1505
  %v1507 = vlaneseq
  %v1508 = vshrl.u32 %v1507, 7
  %v1509 = vsub.s32 %v1506, %v1508
  %v1510 = vrot.slane %v1489, %v1509
  %1511 = vrot.lane.b32.xlu0 %v1510, 32
  %v1512 = vpop.permute.xlu0 %1511
  %s1514 = scalar_lea.vmem [#allocation3], 2
  %1515 = vst.msk [vmem:[%s1514] sm:$0x3] %vm481, %v1512
  %v1516 = vpack.c.bf16 %v1417, %v1417
  %1518 = vrot.lane.b32.xlu0 %v1516, 32
  %v1519 = vpop.permute.xlu0 %1518
  %v1521 = vsel %vm324, %v1519, 0
  %1523 = vmatprep.subr.bf16.mxu0 0
  %1524 = vmatpush1.bf16.msra.mxu0 %v320
  %1525 = vmatprep.subr.bf16.mxu0 0
  %1526 = vmatpush1.bf16.msra.mxu0 %v321
  %1527 = vmatprep.subr.bf16.mxu0 0
  %1528 = vmatpush1.bf16.msra.mxu0 0
  %1529 = vmatprep.subr.bf16.mxu0 0
  %1530 = vmatpush1.bf16.msra.mxu0 0
  %1531 = vmatprep.subr.bf16.mxu0 0
  %1532 = vmatpush1.bf16.msra.mxu0 0
  %1533 = vmatprep.subr.bf16.mxu0 0
  %1534 = vmatpush1.bf16.msra.mxu0 0
  %1535 = vmatprep.subr.bf16.mxu0 0
  %1536 = vmatpush1.bf16.msra.mxu0 0
  %1537 = vmatprep.subr.bf16.mxu0 0
  %1538 = vmatpush1.bf16.msra.mxu0 0
  %1539 = vmatprep.subr.bf16.mxu0 0
  %1540 = vmatpush1.bf16.msra.mxu0 0
  %1541 = vmatprep.subr.bf16.mxu0 0
  %1542 = vmatpush1.bf16.msra.mxu0 0
  %1543 = vmatprep.subr.bf16.mxu0 0
  %1544 = vmatpush1.bf16.msra.mxu0 0
  %1545 = vmatprep.subr.bf16.mxu0 0
  %1546 = vmatpush1.bf16.msra.mxu0 0
  %1547 = vmatprep.subr.bf16.mxu0 0
  %1548 = vmatpush1.bf16.msra.mxu0 0
  %1549 = vmatprep.subr.bf16.mxu0 0
  %1550 = vmatpush1.bf16.msra.mxu0 0
  %1551 = vmatprep.subr.bf16.mxu0 0
  %1552 = vmatpush1.bf16.msra.mxu0 0
  %1553 = vmatprep.subr.bf16.mxu0 0
  %1554 = vmatpush1.bf16.msra.mxu0 0
  %1555 = vmatprep.mubr.bf16.mxu0 0
  %1556 = vmatmul.mubr.bf16.gmra.mrb[0].mxu0 %v1521
  %v1557 = vpop.f32.mrb[0].mxu0
  %v1558 = vadd.f32 0.0, %v1557
  %v1559 = vpop.f32.mrb[0].mxu0
  %v1560 = vpop.f32.mrb[0].mxu0
  %v1561 = vpop.f32.mrb[0].mxu0
  %1562 = vdwg.mxu0
  %v1563 = vadd.f32 %v195, %v1558
  %v1564 = vxor.u32 %v1563, 2147483648
  %v1565 = vmul.f32 %v1564, 1.442695
  %v1566 = vpow.pop %v1565
  %v1567 = vadd.f32 %v1566, 1.0
  %v1568 = vrcp.pop %v1567
  %v1569 = vmul.f32 1.0, %v1568
  %v1570 = vtanh.pop %v1563
  %v1571 = vmul.f32 %v1569, %v1411
  %1573 = vrot.lane.b32.xlu0 %v1570, 64
  %v1574 = vpop.permute.xlu0 %1573
  %v1576 = vmul.f32 %v1569, %v1574
  %1578 = vrot.lane.b32.xlu0 %v1576, 32
  %v1579 = vpop.permute.xlu0 %1578
  %v1581 = vadd.f32 %v1571, %v1579
  %v1582 = vtanh.pop %v1581
  %1584 = vrot.lane.b32.xlu0 %v1582, 64
  %v1585 = vpop.permute.xlu0 %1584
  %v1587 = vmul.f32 %v1569, %v1585
  %v1588 = vpack.c.bf16 %v1489, %v1489
  %1590 = vrot.lane.b32.xlu0 %v1588, 32
  %v1591 = vpop.permute.xlu0 %1590
  %v1593 = vsel %vm324, %v1591, 0
  %1595 = vmatprep.subr.bf16.mxu0 0
  %1596 = vmatpush1.bf16.msra.mxu0 %v401
  %1597 = vmatprep.subr.bf16.mxu0 0
  %1598 = vmatpush1.bf16.msra.mxu0 %v402
  %1599 = vmatprep.subr.bf16.mxu0 0
  %1600 = vmatpush1.bf16.msra.mxu0 0
  %1601 = vmatprep.subr.bf16.mxu0 0
  %1602 = vmatpush1.bf16.msra.mxu0 0
  %1603 = vmatprep.subr.bf16.mxu0 0
  %1604 = vmatpush1.bf16.msra.mxu0 0
  %1605 = vmatprep.subr.bf16.mxu0 0
  %1606 = vmatpush1.bf16.msra.mxu0 0
  %1607 = vmatprep.subr.bf16.mxu0 0
  %1608 = vmatpush1.bf16.msra.mxu0 0
  %1609 = vmatprep.subr.bf16.mxu0 0
  %1610 = vmatpush1.bf16.msra.mxu0 0
  %1611 = vmatprep.subr.bf16.mxu0 0
  %1612 = vmatpush1.bf16.msra.mxu0 0
  %1613 = vmatprep.subr.bf16.mxu0 0
  %1614 = vmatpush1.bf16.msra.mxu0 0
  %1615 = vmatprep.subr.bf16.mxu0 0
  %1616 = vmatpush1.bf16.msra.mxu0 0
  %1617 = vmatprep.subr.bf16.mxu0 0
  %1618 = vmatpush1.bf16.msra.mxu0 0
  %1619 = vmatprep.subr.bf16.mxu0 0
  %1620 = vmatpush1.bf16.msra.mxu0 0
  %1621 = vmatprep.subr.bf16.mxu0 0
  %1622 = vmatpush1.bf16.msra.mxu0 0
  %1623 = vmatprep.subr.bf16.mxu0 0
  %1624 = vmatpush1.bf16.msra.mxu0 0
  %1625 = vmatprep.subr.bf16.mxu0 0
  %1626 = vmatpush1.bf16.msra.mxu0 0
  %1627 = vmatprep.mubr.bf16.mxu0 0
  %1628 = vmatmul.mubr.bf16.gmra.mrb[0].mxu0 %v1593
  %v1629 = vpop.f32.mrb[0].mxu0
  %v1630 = vadd.f32 0.0, %v1629
  %v1631 = vpop.f32.mrb[0].mxu0
  %v1632 = vpop.f32.mrb[0].mxu0
  %v1633 = vpop.f32.mrb[0].mxu0
  %1634 = vdwg.mxu0
  %v1635 = vadd.f32 %v269, %v1630
  %v1636 = vxor.u32 %v1635, 2147483648
  %v1637 = vmul.f32 %v1636, 1.442695
  %v1638 = vpow.pop %v1637
  %v1639 = vadd.f32 %v1638, 1.0
  %v1640 = vrcp.pop %v1639
  %v1641 = vmul.f32 1.0, %v1640
  %v1642 = vtanh.pop %v1635
  %v1643 = vmul.f32 %v1641, %v1483
  %1645 = vrot.lane.b32.xlu0 %v1642, 64
  %v1646 = vpop.permute.xlu0 %1645
  %v1648 = vmul.f32 %v1641, %v1646
  %1650 = vrot.lane.b32.xlu0 %v1648, 32
  %v1651 = vpop.permute.xlu0 %1650
  %v1653 = vadd.f32 %v1643, %v1651
  %v1654 = vtanh.pop %v1653
  %1656 = vrot.lane.b32.xlu0 %v1654, 64
  %v1657 = vpop.permute.xlu0 %1656
  %v1659 = vmul.f32 %v1641, %v1657
  %v1662 = vunpack.c.l.s4 1983009808
  %v1663 = vunpack.c.0.s8 %v1662
  %v1664 = vlaneseq
  %v1665 = vshrl.u32 %v1664, 7
  %v1666 = vsub.s32 %v1663, %v1665
  %v1667 = vrot.slane %v1587, %v1666
  %1668 = vrot.lane.b32.xlu0 %v1667, 32
  %v1669 = vpop.permute.xlu0 %1668
  %s1671 = scalar_lea.vmem [#allocation2], 14
  %1672 = vst.msk [vmem:[%s1671] sm:$0x3] %vm481, %v1669
  %v1675 = vunpack.c.l.s4 1983009808
  %v1676 = vunpack.c.0.s8 %v1675
  %v1677 = vlaneseq
  %v1678 = vshrl.u32 %v1677, 7
  %v1679 = vsub.s32 %v1676, %v1678
  %v1680 = vrot.slane %v1659, %v1679
  %1681 = vrot.lane.b32.xlu0 %v1680, 32
  %v1682 = vpop.permute.xlu0 %1681
  %1684 = vst.msk [vmem:[#allocation3] sm:$0x3] %vm481, %v1682
  %v1685 = vld [vmem:[#allocation2] sm:$0x3]
  %v1686 = vld [vmem:[#allocation2 + $0x2] sm:$0x3]
  %v1687 = vld [vmem:[#allocation2 + $0x4] sm:$0x3]
  %v1688 = vld [vmem:[#allocation2 + $0x6] sm:$0x3]
  %v1689 = vld [vmem:[#allocation2 + $0x8] sm:$0x3]
  %v1690 = vld [vmem:[#allocation2 + $0xa] sm:$0x3]
  %v1691 = vld [vmem:[#allocation2 + $0xc] sm:$0x3]
  %v1692 = vld [vmem:[#allocation2 + $0xe] sm:$0x3]
  %v1693 = vld [vmem:[#allocation3] sm:$0x3]
  %v1694 = vld [vmem:[#allocation3 + $0x2] sm:$0x3]
  %v1695 = vld [vmem:[#allocation3 + $0x4] sm:$0x3]
  %v1696 = vld [vmem:[#allocation3 + $0x6] sm:$0x3]
  %v1697 = vld [vmem:[#allocation3 + $0x8] sm:$0x3]
  %v1698 = vld [vmem:[#allocation3 + $0xa] sm:$0x3]
  %v1699 = vld [vmem:[#allocation3 + $0xc] sm:$0x3]
  %v1700 = vld [vmem:[#allocation3 + $0xe] sm:$0x3]
  %v1709 = vcombine.low %v1685, %v1686
  %v1710 = vcombine.low %v1687, %v1688
  %v1712 = vunpack.c.l.s4 1983009808
  %v1713 = vunpack.c.0.s8 %v1712
  %v1714 = vlaneseq
  %v1715 = vshrl.u32 %v1714, 7
  %v1716 = vsub.s32 %v1713, %v1715
  %v1717 = vrot.slane %v1709, %v1716
  %v1719 = vunpack.c.l.s4 1983009808
  %v1720 = vunpack.c.0.s8 %v1719
  %v1721 = vlaneseq
  %v1722 = vshrl.u32 %v1721, 7
  %v1723 = vsub.s32 %v1720, %v1722
  %v1724 = vrot.slane %v1710, %v1723
  %v1725 = vcombine.low %v1717, %v1724
  %v1726 = vcombine.low %v1689, %v1690
  %v1727 = vcombine.low %v1691, %v1692
  %v1729 = vunpack.c.l.s4 1983009808
  %v1730 = vunpack.c.0.s8 %v1729
  %v1731 = vlaneseq
  %v1732 = vshrl.u32 %v1731, 7
  %v1733 = vsub.s32 %v1730, %v1732
  %v1734 = vrot.slane %v1726, %v1733
  %v1736 = vunpack.c.l.s4 1983009808
  %v1737 = vunpack.c.0.s8 %v1736
  %v1738 = vlaneseq
  %v1739 = vshrl.u32 %v1738, 7
  %v1740 = vsub.s32 %v1737, %v1739
  %v1741 = vrot.slane %v1727, %v1740
  %v1742 = vcombine.low %v1734, %v1741
  %v1753 = vcombine.low %v1693, %v1694
  %v1754 = vcombine.low %v1695, %v1696
  %v1756 = vunpack.c.l.s4 1983009808
  %v1757 = vunpack.c.0.s8 %v1756
  %v1758 = vlaneseq
  %v1759 = vshrl.u32 %v1758, 7
  %v1760 = vsub.s32 %v1757, %v1759
  %v1761 = vrot.slane %v1753, %v1760
  %v1763 = vunpack.c.l.s4 1983009808
  %v1764 = vunpack.c.0.s8 %v1763
  %v1765 = vlaneseq
  %v1766 = vshrl.u32 %v1765, 7
  %v1767 = vsub.s32 %v1764, %v1766
  %v1768 = vrot.slane %v1754, %v1767
  %v1769 = vcombine.low %v1761, %v1768
  %v1770 = vcombine.low %v1697, %v1698
  %v1771 = vcombine.low %v1699, %v1700
  %v1773 = vunpack.c.l.s4 1983009808
  %v1774 = vunpack.c.0.s8 %v1773
  %v1775 = vlaneseq
  %v1776 = vshrl.u32 %v1775, 7
  %v1777 = vsub.s32 %v1774, %v1776
  %v1778 = vrot.slane %v1770, %v1777
  %v1780 = vunpack.c.l.s4 1983009808
  %v1781 = vunpack.c.0.s8 %v1780
  %v1782 = vlaneseq
  %v1783 = vshrl.u32 %v1782, 7
  %v1784 = vsub.s32 %v1781, %v1783
  %v1785 = vrot.slane %v1771, %v1784
  %v1786 = vcombine.low %v1778, %v1785
  %v1789 = vpack.c.bf16 %v1742, %v1725
  %v1790 = vpack.c.bf16 %v1786, %v1769
  %v1791 = vld [vmem:[%s7] sm:$0xf]
  %v1792 = vld [vmem:[%s7 + $0x4] sm:$0xf]
  %v1793 = vld [vmem:[%s7 + $0x8] sm:$0xf]
  %v1794 = vld [vmem:[%s7 + $0xc] sm:$0xf]
  %v1795 = vld [vmem:[%s8] sm:$0x1]
  %v1797 = vlaneseq
  %v1798 = vshrl.u32 %v1797, 7
  %v1799 = vsub.s32 0, %v1798
  %v1800 = vrot.slane %v1795, %v1799
  %v1806 = vunpack.c.l.b16 %v1791
  %v1807 = vunpack.c.l.b16 %v1792
  %v1808 = vunpack.c.l.b16 %v1793
  %v1809 = vunpack.c.l.b16 %v1794
  %v1810 = vpack.c.b16 %v1807, %v1806
  %v1811 = vpack.c.b16 %v1809, %v1808
  %v1815 = vsel %vm324, %v1789, 0
  %v1818 = vsel %vm324, %v1790, 0
  %1820 = vmatprep.subr.bf16.mxu0 0
  %1821 = vmatpush1.bf16.msra.mxu0 %v1810
  %1822 = vmatprep.subr.bf16.mxu0 0
  %1823 = vmatpush1.bf16.msra.mxu0 %v1811
  %1824 = vmatprep.subr.bf16.mxu0 0
  %1825 = vmatpush1.bf16.msra.mxu0 0
  %1826 = vmatprep.subr.bf16.mxu0 0
  %1827 = vmatpush1.bf16.msra.mxu0 0
  %1828 = vmatprep.subr.bf16.mxu0 0
  %1829 = vmatpush1.bf16.msra.mxu0 0
  %1830 = vmatprep.subr.bf16.mxu0 0
  %1831 = vmatpush1.bf16.msra.mxu0 0
  %1832 = vmatprep.subr.bf16.mxu0 0
  %1833 = vmatpush1.bf16.msra.mxu0 0
  %1834 = vmatprep.subr.bf16.mxu0 0
  %1835 = vmatpush1.bf16.msra.mxu0 0
  %1836 = vmatprep.subr.bf16.mxu0 0
  %1837 = vmatpush1.bf16.msra.mxu0 0
  %1838 = vmatprep.subr.bf16.mxu0 0
  %1839 = vmatpush1.bf16.msra.mxu0 0
  %1840 = vmatprep.subr.bf16.mxu0 0
  %1841 = vmatpush1.bf16.msra.mxu0 0
  %1842 = vmatprep.subr.bf16.mxu0 0
  %1843 = vmatpush1.bf16.msra.mxu0 0
  %1844 = vmatprep.subr.bf16.mxu0 0
  %1845 = vmatpush1.bf16.msra.mxu0 0
  %1846 = vmatprep.subr.bf16.mxu0 0
  %1847 = vmatpush1.bf16.msra.mxu0 0
  %1848 = vmatprep.subr.bf16.mxu0 0
  %1849 = vmatpush1.bf16.msra.mxu0 0
  %1850 = vmatprep.subr.bf16.mxu0 0
  %1851 = vmatpush1.bf16.msra.mxu0 0
  %1852 = vmatprep.mubr.bf16.mxu0 0
  %1853 = vmatmul.mubr.bf16.gmra.mrb[0].mxu0 %v1815
  %v1854 = vpop.f32.mrb[0].mxu0
  %v1855 = vadd.f32 %v1800, %v1854
  %v1856 = vpop.f32.mrb[0].mxu0
  %v1857 = vpop.f32.mrb[0].mxu0
  %v1858 = vadd.f32 %v1800, %v1857
  %v1859 = vpop.f32.mrb[0].mxu0
  %1860 = vmatprep.mubr.bf16.mxu0 0
  %1861 = vmatmul.mubr.bf16.gmra.mrb[0].mxu0 %v1818
  %v1862 = vpop.f32.mrb[0].mxu0
  %v1863 = vadd.f32 %v1800, %v1862
  %v1864 = vpop.f32.mrb[0].mxu0
  %v1865 = vpop.f32.mrb[0].mxu0
  %v1866 = vadd.f32 %v1800, %v1865
  %v1867 = vpop.f32.mrb[0].mxu0
  %1868 = vdwg.mxu0
  %v1871 = vcombine.high %v1855, %v1855
  %v1873 = vunpack.c.l.s4 1983009808
  %v1874 = vunpack.c.0.s8 %v1873
  %v1875 = vlaneseq
  %v1876 = vshrl.u32 %v1875, 7
  %v1877 = vsub.s32 %v1874, %v1876
  %v1878 = vrot.slane %v1855, %v1877
  %v1880 = vunpack.c.l.s4 1983009808
  %v1881 = vunpack.c.0.s8 %v1880
  %v1882 = vlaneseq
  %v1883 = vshrl.u32 %v1882, 7
  %v1884 = vsub.s32 %v1881, %v1883
  %v1885 = vrot.slane %v1871, %v1884
  %v1886 = vcombine.high %v1878, %v1878
  %v1887 = vcombine.high %v1885, %v1885
  %v1888 = vcombine.high %v1858, %v1858
  %v1890 = vunpack.c.l.s4 1983009808
  %v1891 = vunpack.c.0.s8 %v1890
  %v1892 = vlaneseq
  %v1893 = vshrl.u32 %v1892, 7
  %v1894 = vsub.s32 %v1891, %v1893
  %v1895 = vrot.slane %v1858, %v1894
  %v1897 = vunpack.c.l.s4 1983009808
  %v1898 = vunpack.c.0.s8 %v1897
  %v1899 = vlaneseq
  %v1900 = vshrl.u32 %v1899, 7
  %v1901 = vsub.s32 %v1898, %v1900
  %v1902 = vrot.slane %v1888, %v1901
  %v1903 = vcombine.high %v1895, %v1895
  %v1904 = vcombine.high %v1902, %v1902
  %1913 = vst [vmem:[%s9] sm:$0x3] %v1878
  %1914 = vst [vmem:[%s9 + $0x2] sm:$0x3] %v1886
  %1915 = vst [vmem:[%s9 + $0x4] sm:$0x3] %v1885
  %1916 = vst [vmem:[%s9 + $0x6] sm:$0x3] %v1887
  %1917 = vst [vmem:[%s9 + $0x8] sm:$0x3] %v1895
  %1918 = vst [vmem:[%s9 + $0xa] sm:$0x3] %v1903
  %1919 = vst [vmem:[%s9 + $0xc] sm:$0x3] %v1902
  %1920 = vst [vmem:[%s9 + $0xe] sm:$0x3] %v1904
  %v1923 = vcombine.high %v1863, %v1863
  %v1925 = vunpack.c.l.s4 1983009808
  %v1926 = vunpack.c.0.s8 %v1925
  %v1927 = vlaneseq
  %v1928 = vshrl.u32 %v1927, 7
  %v1929 = vsub.s32 %v1926, %v1928
  %v1930 = vrot.slane %v1863, %v1929
  %v1932 = vunpack.c.l.s4 1983009808
  %v1933 = vunpack.c.0.s8 %v1932
  %v1934 = vlaneseq
  %v1935 = vshrl.u32 %v1934, 7
  %v1936 = vsub.s32 %v1933, %v1935
  %v1937 = vrot.slane %v1923, %v1936
  %v1938 = vcombine.high %v1930, %v1930
  %v1939 = vcombine.high %v1937, %v1937
  %v1940 = vcombine.high %v1866, %v1866
  %v1942 = vunpack.c.l.s4 1983009808
  %v1943 = vunpack.c.0.s8 %v1942
  %v1944 = vlaneseq
  %v1945 = vshrl.u32 %v1944, 7
  %v1946 = vsub.s32 %v1943, %v1945
  %v1947 = vrot.slane %v1866, %v1946
  %v1949 = vunpack.c.l.s4 1983009808
  %v1950 = vunpack.c.0.s8 %v1949
  %v1951 = vlaneseq
  %v1952 = vshrl.u32 %v1951, 7
  %v1953 = vsub.s32 %v1950, %v1952
  %v1954 = vrot.slane %v1940, %v1953
  %v1955 = vcombine.high %v1947, %v1947
  %v1956 = vcombine.high %v1954, %v1954
  %1965 = vst [vmem:[%s10] sm:$0x3] %v1930
  %1966 = vst [vmem:[%s10 + $0x2] sm:$0x3] %v1938
  %1967 = vst [vmem:[%s10 + $0x4] sm:$0x3] %v1937
  %1968 = vst [vmem:[%s10 + $0x6] sm:$0x3] %v1939
  %1969 = vst [vmem:[%s10 + $0x8] sm:$0x3] %v1947
  %1970 = vst [vmem:[%s10 + $0xa] sm:$0x3] %v1955
  %1971 = vst [vmem:[%s10 + $0xc] sm:$0x3] %v1954
  %1972 = vst [vmem:[%s10 + $0xe] sm:$0x3] %v1956
  // Predicated region
  $region38: #{lm_forward.1} parent=0 // pred_check
    _
  $region39: #{lm_forward.1} parent=0 // pred_check_branch
    %1974 = sbr.rel (0) target = $region41
  $region40: #{lm_forward.1} parent=0 // pred_region
    _
  $region41: #{lm_forward.1} parent=0 // pred_fallthru
    _
  // Predicated region
  $region42: #{lm_forward.1} parent=0 // pred_check
    _
  $region43: #{lm_forward.1} parent=0 // pred_check_branch
    %1976 = sbr.rel (0) target = $region45
  $region44: #{lm_forward.1} parent=0 // pred_region
    _
  $region45: #{lm_forward.1} parent=0 // pred_fallthru
    _
  // Predicated region
  $region46: #{lm_forward.1} parent=0 // pred_check
    _
  $region47: #{lm_forward.1} parent=0 // pred_check_branch
    %1978 = sbr.rel (0) target = $region49
  $region48: #{lm_forward.1} parent=0 // pred_region
    _
  $region49: #{lm_forward.1} parent=0 // pred_fallthru
    _
  // Predicated region
  $region50: #{lm_forward.1} parent=0 // pred_check
    _
  $region51: #{lm_forward.1} parent=0 // pred_check_branch
    %1980 = sbr.rel (0) target = $region53
  $region52: #{lm_forward.1} parent=0 // pred_region
    _
  $region53: #{lm_forward.1} parent=0 // pred_fallthru
    _

</llo_original>
